<compile_context>
chip_gen: v5e
topology: v5e:2x2
jax: 0.10.0
libtpu: 0.0.40
codegen_flags: <defaults>
</compile_context>

<pallas_src>
import numpy as np
import jax
import jax.numpy as jnp
from jax import lax
from jax.experimental import pallas as pl
from jax.experimental.pallas import tpu as pltpu

# ----------------------------- problem sizes --------------------------------
N, C_IN, H, W = 2, 4, 16, 16
C_OUT = 32
REDUCTION = 16
HID = max(C_OUT // REDUCTION, 1)
KH = KW = 3          # transform conv kernel
SKH = SKW = 7        # CBAM spatial-gate conv kernel
NEG_SLOPE = 0.2
EPS = 1e-5
HW = H * W
M = N * HW
K36 = KH * KW * C_IN          # im2col contraction size (= 36)

# ---- packed parameter-slab column layout (single (C_OUT, 128) f32 tile) ----
COL_W36 = 0                   # [:, 0:36]        folded conv weights^T (C_OUT, 36)
COL_G = COL_W36 + K36         # 36               BN gamma        (C_OUT,)
COL_B = COL_G + 1             # 37               BN beta         (C_OUT,)
COL_W2 = COL_B + 1            # 38:38+HID        channel-gate W2 (C_OUT, HID)
COL_B2 = COL_W2 + HID         # 40               channel-gate b2 (C_OUT,)
COL_W1 = COL_B2 + 1           # 41:41+C_OUT      channel-gate W1 (HID, C_OUT) rows 0:HID
COL_B1 = COL_W1 + C_OUT       # 73               channel-gate b1 (HID,)       rows 0:HID
COL_SBN = COL_B1 + 1          # 74               spatial BN [gamma, beta]     rows 0:2
SLAB_COLS = 128


# ------------------------------ fused kernel --------------------------------
def block_kernel(patch_ref, slab_ref, sc_ref, o_ref):
    f32 = jnp.float32
    inv_m = 1.0 / M            # compile-time reciprocals (exact powers of two)
    inv_hw = 1.0 / HW
    inv_c = 1.0 / C_OUT

    # ---- LeakyReLU(0.2) on the im2col patch.  LeakyReLU(0) = 0, so the
    #      zero halo folded into the patch is unaffected. ----
    p = patch_ref[...]                                    # (36, 512)
    pa = jnp.where(p > 0, p, NEG_SLOPE * p)

    # ---- Conv2d 3x3 / pad=1: ONE MXU matmul, channels-on-sublanes layout ----
    w36t = slab_ref[:, COL_W36:COL_W36 + K36]             # (32, 36)
    y = jnp.dot(w36t, pa, preferred_element_type=f32)     # (32, 512)
    # conv bias omitted: exactly cancelled by the training-mode BN below.

    # ---- BatchNorm2d(C_OUT), training-mode batch stats (two-pass variance) --
    gamma = slab_ref[:, COL_G:COL_G + 1]                  # (32, 1)
    beta = slab_ref[:, COL_B:COL_B + 1]                   # (32, 1)
    mu = jnp.sum(y, axis=1, keepdims=True) * inv_m
    d = y - mu
    var = jnp.sum(d * d, axis=1, keepdims=True) * inv_m
    x1 = d * (gamma * lax.rsqrt(var + EPS)) + beta        # (32, 512)

    # ---- CBAM ChannelGate: spatial avg/max pools -> ONE stacked MLP pass ----
    pools = [jnp.sum(x1[:, n * HW:(n + 1) * HW], axis=1, keepdims=True) * inv_hw
             for n in range(N)]
    pools += [jnp.max(x1[:, n * HW:(n + 1) * HW], axis=1, keepdims=True)
              for n in range(N)]
    stacked = jnp.concatenate(pools, axis=1)              # (32, 2N): avg0,avg1,max0,max1

    w1 = slab_ref[0:HID, COL_W1:COL_W1 + C_OUT]           # (HID, 32)
    b1 = slab_ref[0:HID, COL_B1:COL_B1 + 1]               # (HID, 1)
    w2 = slab_ref[:, COL_W2:COL_W2 + HID]                 # (32, HID)
    b2 = slab_ref[:, COL_B2:COL_B2 + 1]                   # (32, 1)
    hmid = jnp.maximum(jnp.dot(w1, stacked, preferred_element_type=f32) + b1, 0.0)
    att = jnp.dot(w2, hmid, preferred_element_type=f32) + b2        # (32, 2N)
    cgate = jax.nn.sigmoid(att[:, 0:N] + att[:, N:2 * N])           # (32, N)

    # apply channel gate per batch column-block (256-lane aligned slices)
    x2 = jnp.concatenate(
        [x1[:, n * HW:(n + 1) * HW] * cgate[:, n:n + 1] for n in range(N)],
        axis=1)                                           # (32, 512)

    # ---- CBAM SpatialGate: channel max/mean pool -> 7x7 conv(2->1) as ONE
    #      matmul against the precomputed conv matrix (padding folded in) ----
    cmax = jnp.max(x2, axis=0, keepdims=True)             # (1, 512)
    cmean = jnp.sum(x2, axis=0, keepdims=True) * inv_c    # (1, 512)
    pmap = jnp.concatenate(
        [jnp.concatenate([cmax[:, n * HW:(n + 1) * HW],
                          cmean[:, n * HW:(n + 1) * HW]], axis=1)
         for n in range(N)], axis=0)                      # (N, 2*HW) = (2, 512)
    s = jnp.dot(pmap, sc_ref[...], preferred_element_type=f32)      # (2, 256)

    # BatchNorm2d(1) (training-mode batch stats over all N*H*W) + sigmoid
    sg = slab_ref[0:1, COL_SBN:COL_SBN + 1]               # (1, 1) gamma
    sb = slab_ref[1:2, COL_SBN:COL_SBN + 1]               # (1, 1) beta
    smu = jnp.sum(s, axis=(0, 1), keepdims=True) * inv_m
    sd = s - smu
    svar = jnp.sum(sd * sd, axis=(0, 1), keepdims=True) * inv_m
    sgate = jax.nn.sigmoid(sd * (sg * lax.rsqrt(svar + EPS)) + sb)  # (2, 256)

    # ---- apply gate; output already in flattened-NCHW (N*C_OUT, H*W) order --
    for n in range(N):
        o_ref[n * C_OUT:(n + 1) * C_OUT, :] = (
            x2[:, n * HW:(n + 1) * HW] * sgate[n:n + 1, :])


def fused_block(patch_t, params):
    vmem = pl.BlockSpec(memory_space=pltpu.MemorySpace.VMEM)
    return pl.pallas_call(
        block_kernel,
        out_shape=jax.ShapeDtypeStruct((N * C_OUT, HW), jnp.float32),
        in_specs=[vmem, vmem, vmem],
        out_specs=vmem,
    )(patch_t, params["slab"], params["scmat"])


# ------------------------------- wrapper -------------------------------------
def _im2col_t(x):
    """NCHW (N,C_IN,H,W) -> (KH*KW*C_IN, N*H*W) im2col^T for 3x3 / pad=1.
    Row = (dy*KW+dx)*C_IN + ci ; column = n*H*W + h*W + w.  Tiny XLA glue."""
    xpad = jnp.pad(x, ((0, 0), (0, 0), (1, 1), (1, 1)))
    taps = [xpad[:, :, dy:dy + H, dx:dx + W]
            for dy in range(KH) for dx in range(KW)]       # each (N, C_IN, H, W)
    patch = jnp.stack(taps, axis=0)                        # (9, N, C_IN, H, W)
    return jnp.transpose(patch, (0, 2, 1, 3, 4)).reshape(K36, M)


@jax.jit
def block_forward(params, *xs):
    # torch: x = th.cat(xs, dim=1)  (NCHW channel concat)  -- wrapper glue
    x = jnp.concatenate(xs, axis=1)
    n, c_in, h, w = x.shape
    assert (n, c_in, h, w) == (N, C_IN, H, W), (n, c_in, h, w)
    patch_t = _im2col_t(x)                                 # (36, 512) ~ 72 KiB
    out2d = fused_block(patch_t, params)                   # (N*C_OUT, H*W), NCHW order
    return out2d.reshape(n, C_OUT, h, w)                   # free reshape, no transpose


# ----------------------- host-side constant packing --------------------------
def _pack_param_slab(conv_w, bn_gamma, bn_beta, w1, b1, w2, b2, sbn):
    """Pack every parameter tensor into one (C_OUT, 128) f32 VMEM tile."""
    slab = np.zeros((C_OUT, SLAB_COLS), np.float32)
    # folded conv weights^T: W36T[co, t*C_IN+ci] == torch W[co, ci, dy, dx]
    slab[:, COL_W36:COL_W36 + K36] = conv_w.reshape(K36, C_OUT).T
    slab[:, COL_G] = bn_gamma
    slab[:, COL_B] = bn_beta
    slab[:, COL_W2:COL_W2 + HID] = w2
    slab[:, COL_B2] = b2
    slab[0:HID, COL_W1:COL_W1 + C_OUT] = w1
    slab[0:HID, COL_B1] = b1
    slab[0:2, COL_SBN] = sbn
    return jnp.asarray(slab)


def _spatial_conv_matrix(k):
    """(2,7,7) spatial-gate conv weights -> (2*H*W, H*W) matrix with the 7x7
    conv (pad=3, in-channels [max, mean], no bias) and zero padding folded in:
        SC[ch*H*W + hi*W + wi, ho*W + wo] = k[ch, hi-ho+3, wi-wo+3]."""
    sc = np.zeros((2 * HW, HW), np.float32)
    for ch in range(2):
        for ho in range(H):
            for wo in range(W):
                o = ho * W + wo
                for dy in range(SKH):
                    hi = ho + dy - SKH // 2
                    if not 0 <= hi < H:
                        continue
                    for dx in range(SKW):
                        wi = wo + dx - SKW // 2
                        if not 0 <= wi < W:
                            continue
                        sc[ch * HW + hi * W + wi, o] = float(k[ch, dy, dx])
    return jnp.asarray(sc)


# ----------------------------- parameter init --------------------------------
def init_params(key):
    ks = jax.random.split(key, 7)
    # Conv2d(C_IN, C_OUT, 3, padding=1): conv_w[t, ci, co] == torch W[co, ci, dy, dx]
    conv_w = np.asarray(jax.random.normal(ks[0], (KH * KW, C_IN, C_OUT), jnp.float32)) * 0.1
    # The torch conv bias exists but is exactly cancelled by the training-mode
    # BatchNorm that follows (mean-subtracted, variance unchanged), so it is
    # not passed to the kernel.
    # TODO(synk): reinstate the bias (and BN running-stat updates / eval-mode
    # normalization) if the BatchNorm is ever run with running statistics.
    _conv_b = np.asarray(jax.random.normal(ks[1], (C_OUT,), jnp.float32)) * 0.1  # noqa: F841
    bn_gamma = np.ones(C_OUT, np.float32)         # BatchNorm2d default init
    bn_beta = np.zeros(C_OUT, np.float32)
    # CBAM ChannelGate MLP: Linear(C_OUT, HID) -> ReLU -> Linear(HID, C_OUT)
    w1 = np.asarray(jax.random.normal(ks[2], (HID, C_OUT), jnp.float32)) * 0.1
    b1 = np.asarray(jax.random.normal(ks[3], (HID,), jnp.float32)) * 0.1
    w2 = np.asarray(jax.random.normal(ks[4], (C_OUT, HID), jnp.float32)) * 0.1
    b2 = np.asarray(jax.random.normal(ks[5], (C_OUT,), jnp.float32)) * 0.1
    # CBAM SpatialGate: 7x7 conv (out=1, in=2 [max, mean], no bias) + BN(1)
    sconv = np.asarray(jax.random.normal(ks[6], (2, SKH, SKW), jnp.float32)) * 0.1
    sbn = np.array([1.0, 0.0], np.float32)        # BatchNorm2d(1) gamma, beta
    # TODO(synk): dropout / instance-norm / layer-norm / dim!=2 branches are not
    # taken with the module defaults (dropout=-1, normalizor='batch', dim=2).
    return {
        "slab": _pack_param_slab(conv_w, bn_gamma, bn_beta, w1, b1, w2, b2, sbn),
        "scmat": _spatial_conv_matrix(sconv),
    }


if __name__ == "__main__":
    key = jax.random.PRNGKey(0)
    kx, kp = jax.random.split(key)
    x = jax.random.normal(kx, (N, C_IN, H, W), jnp.float32)   # NCHW, like PyTorch
    params = init_params(kp)

    out = jax.block_until_ready(block_forward(params, x))
    assert out.shape == (N, C_OUT, H, W), out.shape
    assert bool(jnp.isfinite(out).all())
    print("KERNEL_OK")
</pallas_src>

<mosaic_0001>
module attributes {stable_mosaic.version = 11 : i64} {
  func.func @block_kernel(%arg0: memref<36x512xf32, #tpu.memory_space<vmem>>, %arg1: memref<32x128xf32, #tpu.memory_space<vmem>>, %arg2: memref<512x256xf32, #tpu.memory_space<vmem>>, %arg3: memref<64x256xf32, #tpu.memory_space<vmem>>) attributes {dimension_semantics = [], scalar_prefetch = 0 : i64, scratch_operands = 0 : i64, tpu.core_type = #tpu.core_type<tc>} {
    %c0 = arith.constant 0 : index
    %c0_0 = arith.constant 0 : index
    %0 = vector.load %arg0[%c0, %c0_0] : memref<36x512xf32, #tpu.memory_space<vmem>>, vector<36x512xf32>
    %cst = arith.constant 0.000000e+00 : f32
    %1 = vector.broadcast %cst : f32 to vector<36x512xf32>
    %2 = arith.cmpf ogt, %0, %1 : vector<36x512xf32>
    %cst_1 = arith.constant 2.000000e-01 : f32
    %3 = vector.broadcast %cst_1 : f32 to vector<36x512xf32>
    %4 = arith.mulf %3, %0 : vector<36x512xf32>
    %5 = arith.select %2, %0, %4 : vector<36x512xi1>, vector<36x512xf32>
    %c0_2 = arith.constant 0 : index
    %c0_3 = arith.constant 0 : index
    %6 = vector.load %arg1[%c0_2, %c0_3] : memref<32x128xf32, #tpu.memory_space<vmem>>, vector<32x36xf32>
    %cst_4 = arith.constant dense<0.000000e+00> : vector<32x512xf32>
    %7 = tpu.matmul %6, %5, %cst_4 {dimension_numbers = #tpu.dot_dimension_numbers<[1], [0], [0], [1], [0, 0, 1, 1], [], []>} : vector<32x36xf32>, vector<36x512xf32>, vector<32x512xf32> -> vector<32x512xf32>
    %c0_5 = arith.constant 0 : index
    %c36 = arith.constant 36 : index
    %8 = vector.load %arg1[%c0_5, %c36] : memref<32x128xf32, #tpu.memory_space<vmem>>, vector<32x1xf32>
    %c0_6 = arith.constant 0 : index
    %c37 = arith.constant 37 : index
    %9 = vector.load %arg1[%c0_6, %c37] : memref<32x128xf32, #tpu.memory_space<vmem>>, vector<32x1xf32>
    %cst_7 = arith.constant dense<0.000000e+00> : vector<32xf32>
    %10 = vector.multi_reduction <add>, %7, %cst_7 [1] : vector<32x512xf32> to vector<32xf32>
    %11 = vector.shape_cast %10 : vector<32xf32> to vector<32x1xf32>
    %cst_8 = arith.constant 0.001953125 : f32
    %12 = vector.broadcast %cst_8 : f32 to vector<32x1xf32>
    %13 = arith.mulf %11, %12 : vector<32x1xf32>
    %14 = vector.broadcast %13 : vector<32x1xf32> to vector<32x512xf32>
    %15 = arith.subf %7, %14 : vector<32x512xf32>
    %16 = arith.mulf %15, %15 : vector<32x512xf32>
    %cst_9 = arith.constant dense<0.000000e+00> : vector<32xf32>
    %17 = vector.multi_reduction <add>, %16, %cst_9 [1] : vector<32x512xf32> to vector<32xf32>
    %18 = vector.shape_cast %17 : vector<32xf32> to vector<32x1xf32>
    %cst_10 = arith.constant 0.001953125 : f32
    %19 = vector.broadcast %cst_10 : f32 to vector<32x1xf32>
    %20 = arith.mulf %18, %19 : vector<32x1xf32>
    %cst_11 = arith.constant 9.99999974E-6 : f32
    %21 = vector.broadcast %cst_11 : f32 to vector<32x1xf32>
    %22 = arith.addf %20, %21 : vector<32x1xf32>
    %23 = math.rsqrt %22 : vector<32x1xf32>
    %24 = arith.mulf %8, %23 : vector<32x1xf32>
    %25 = vector.broadcast %24 : vector<32x1xf32> to vector<32x512xf32>
    %26 = arith.mulf %15, %25 : vector<32x512xf32>
    %27 = vector.broadcast %9 : vector<32x1xf32> to vector<32x512xf32>
    %28 = arith.addf %26, %27 : vector<32x512xf32>
    %29 = vector.extract_strided_slice %28 {offsets = [0, 0], sizes = [32, 256], strides = [1, 1]} : vector<32x512xf32> to vector<32x256xf32>
    %cst_12 = arith.constant dense<0.000000e+00> : vector<32xf32>
    %30 = vector.multi_reduction <add>, %29, %cst_12 [1] : vector<32x256xf32> to vector<32xf32>
    %31 = vector.shape_cast %30 : vector<32xf32> to vector<32x1xf32>
    %cst_13 = arith.constant 3.906250e-03 : f32
    %32 = vector.broadcast %cst_13 : f32 to vector<32x1xf32>
    %33 = arith.mulf %31, %32 : vector<32x1xf32>
    %34 = vector.extract_strided_slice %28 {offsets = [0, 256], sizes = [32, 256], strides = [1, 1]} : vector<32x512xf32> to vector<32x256xf32>
    %cst_14 = arith.constant dense<0.000000e+00> : vector<32xf32>
    %35 = vector.multi_reduction <add>, %34, %cst_14 [1] : vector<32x256xf32> to vector<32xf32>
    %36 = vector.shape_cast %35 : vector<32xf32> to vector<32x1xf32>
    %cst_15 = arith.constant 3.906250e-03 : f32
    %37 = vector.broadcast %cst_15 : f32 to vector<32x1xf32>
    %38 = arith.mulf %36, %37 : vector<32x1xf32>
    %39 = vector.extract_strided_slice %28 {offsets = [0, 0], sizes = [32, 256], strides = [1, 1]} : vector<32x512xf32> to vector<32x256xf32>
    %cst_16 = arith.constant dense<0xFF800000> : vector<32xf32>
    %40 = vector.multi_reduction <maximumf>, %39, %cst_16 [1] : vector<32x256xf32> to vector<32xf32>
    %41 = vector.shape_cast %40 : vector<32xf32> to vector<32x1xf32>
    %42 = vector.extract_strided_slice %28 {offsets = [0, 256], sizes = [32, 256], strides = [1, 1]} : vector<32x512xf32> to vector<32x256xf32>
    %cst_17 = arith.constant dense<0xFF800000> : vector<32xf32>
    %43 = vector.multi_reduction <maximumf>, %42, %cst_17 [1] : vector<32x256xf32> to vector<32xf32>
    %44 = vector.shape_cast %43 : vector<32xf32> to vector<32x1xf32>
    %45 = tpu.concatenate %33, %38, %41, %44 in 1 : vector<32x1xf32>, vector<32x1xf32>, vector<32x1xf32>, vector<32x1xf32> -> vector<32x4xf32>
    %c0_18 = arith.constant 0 : index
    %c41 = arith.constant 41 : index
    %46 = vector.load %arg1[%c0_18, %c41] : memref<32x128xf32, #tpu.memory_space<vmem>>, vector<2x32xf32>
    %c0_19 = arith.constant 0 : index
    %c73 = arith.constant 73 : index
    %47 = vector.load %arg1[%c0_19, %c73] : memref<32x128xf32, #tpu.memory_space<vmem>>, vector<2x1xf32>
    %c0_20 = arith.constant 0 : index
    %c38 = arith.constant 38 : index
    %48 = vector.load %arg1[%c0_20, %c38] : memref<32x128xf32, #tpu.memory_space<vmem>>, vector<32x2xf32>
    %c0_21 = arith.constant 0 : index
    %c40 = arith.constant 40 : index
    %49 = vector.load %arg1[%c0_21, %c40] : memref<32x128xf32, #tpu.memory_space<vmem>>, vector<32x1xf32>
    %cst_22 = arith.constant dense<0.000000e+00> : vector<2x4xf32>
    %50 = tpu.matmul %46, %45, %cst_22 {dimension_numbers = #tpu.dot_dimension_numbers<[1], [0], [0], [1], [0, 0, 1, 1], [], []>} : vector<2x32xf32>, vector<32x4xf32>, vector<2x4xf32> -> vector<2x4xf32>
    %51 = vector.broadcast %47 : vector<2x1xf32> to vector<2x4xf32>
    %52 = arith.addf %50, %51 : vector<2x4xf32>
    %cst_23 = arith.constant 0.000000e+00 : f32
    %53 = vector.broadcast %cst_23 : f32 to vector<2x4xf32>
    %54 = arith.maximumf %52, %53 : vector<2x4xf32>
    %cst_24 = arith.constant dense<0.000000e+00> : vector<32x4xf32>
    %55 = tpu.matmul %48, %54, %cst_24 {dimension_numbers = #tpu.dot_dimension_numbers<[1], [0], [0], [1], [0, 0, 1, 1], [], []>} : vector<32x2xf32>, vector<2x4xf32>, vector<32x4xf32> -> vector<32x4xf32>
    %56 = vector.broadcast %49 : vector<32x1xf32> to vector<32x4xf32>
    %57 = arith.addf %55, %56 : vector<32x4xf32>
    %58 = vector.extract_strided_slice %57 {offsets = [0, 0], sizes = [32, 2], strides = [1, 1]} : vector<32x4xf32> to vector<32x2xf32>
    %59 = vector.extract_strided_slice %57 {offsets = [0, 2], sizes = [32, 2], strides = [1, 1]} : vector<32x4xf32> to vector<32x2xf32>
    %60 = arith.addf %58, %59 : vector<32x2xf32>
    %61 = arith.negf %60 : vector<32x2xf32>
    %62 = math.exp %61 : vector<32x2xf32>
    %cst_25 = arith.constant 1.000000e+00 : f32
    %63 = vector.broadcast %cst_25 : f32 to vector<32x2xf32>
    %64 = arith.addf %63, %62 : vector<32x2xf32>
    %65 = arith.divf %63, %64 : vector<32x2xf32>
    %66 = vector.extract_strided_slice %28 {offsets = [0, 0], sizes = [32, 256], strides = [1, 1]} : vector<32x512xf32> to vector<32x256xf32>
    %67 = vector.extract_strided_slice %65 {offsets = [0, 0], sizes = [32, 1], strides = [1, 1]} : vector<32x2xf32> to vector<32x1xf32>
    %68 = vector.broadcast %67 : vector<32x1xf32> to vector<32x256xf32>
    %69 = arith.mulf %66, %68 : vector<32x256xf32>
    %70 = vector.extract_strided_slice %28 {offsets = [0, 256], sizes = [32, 256], strides = [1, 1]} : vector<32x512xf32> to vector<32x256xf32>
    %71 = vector.extract_strided_slice %65 {offsets = [0, 1], sizes = [32, 1], strides = [1, 1]} : vector<32x2xf32> to vector<32x1xf32>
    %72 = vector.broadcast %71 : vector<32x1xf32> to vector<32x256xf32>
    %73 = arith.mulf %70, %72 : vector<32x256xf32>
    %74 = tpu.concatenate %69, %73 in 1 : vector<32x256xf32>, vector<32x256xf32> -> vector<32x512xf32>
    %cst_26 = arith.constant dense<0xFF800000> : vector<512xf32>
    %75 = vector.multi_reduction <maximumf>, %74, %cst_26 [0] : vector<32x512xf32> to vector<512xf32>
    %76 = vector.shape_cast %75 : vector<512xf32> to vector<1x512xf32>
    %cst_27 = arith.constant dense<0.000000e+00> : vector<512xf32>
    %77 = vector.multi_reduction <add>, %74, %cst_27 [0] : vector<32x512xf32> to vector<512xf32>
    %78 = vector.shape_cast %77 : vector<512xf32> to vector<1x512xf32>
    %cst_28 = arith.constant 3.125000e-02 : f32
    %79 = vector.broadcast %cst_28 : f32 to vector<1x512xf32>
    %80 = arith.mulf %78, %79 : vector<1x512xf32>
    %81 = vector.extract_strided_slice %76 {offsets = [0, 0], sizes = [1, 256], strides = [1, 1]} : vector<1x512xf32> to vector<1x256xf32>
    %82 = vector.extract_strided_slice %80 {offsets = [0, 0], sizes = [1, 256], strides = [1, 1]} : vector<1x512xf32> to vector<1x256xf32>
    %83 = tpu.concatenate %81, %82 in 1 : vector<1x256xf32>, vector<1x256xf32> -> vector<1x512xf32>
    %84 = vector.extract_strided_slice %76 {offsets = [0, 256], sizes = [1, 256], strides = [1, 1]} : vector<1x512xf32> to vector<1x256xf32>
    %85 = vector.extract_strided_slice %80 {offsets = [0, 256], sizes = [1, 256], strides = [1, 1]} : vector<1x512xf32> to vector<1x256xf32>
    %86 = tpu.concatenate %84, %85 in 1 : vector<1x256xf32>, vector<1x256xf32> -> vector<1x512xf32>
    %87 = tpu.concatenate %83, %86 in 0 : vector<1x512xf32>, vector<1x512xf32> -> vector<2x512xf32>
    %c0_29 = arith.constant 0 : index
    %c0_30 = arith.constant 0 : index
    %88 = vector.load %arg2[%c0_29, %c0_30] : memref<512x256xf32, #tpu.memory_space<vmem>>, vector<512x256xf32>
    %cst_31 = arith.constant dense<0.000000e+00> : vector<2x256xf32>
    %89 = tpu.matmul %87, %88, %cst_31 {dimension_numbers = #tpu.dot_dimension_numbers<[1], [0], [0], [1], [0, 0, 1, 1], [], []>} : vector<2x512xf32>, vector<512x256xf32>, vector<2x256xf32> -> vector<2x256xf32>
    %c0_32 = arith.constant 0 : index
    %c74 = arith.constant 74 : index
    %90 = vector.load %arg1[%c0_32, %c74] : memref<32x128xf32, #tpu.memory_space<vmem>>, vector<1x1xf32>
    %c1 = arith.constant 1 : index
    %c74_33 = arith.constant 74 : index
    %91 = vector.load %arg1[%c1, %c74_33] : memref<32x128xf32, #tpu.memory_space<vmem>>, vector<1x1xf32>
    %92 = vector.shape_cast %89 : vector<2x256xf32> to vector<1x2x256xf32>
    %cst_34 = arith.constant dense<0.000000e+00> : vector<1xf32>
    %93 = vector.multi_reduction <add>, %92, %cst_34 [1, 2] : vector<1x2x256xf32> to vector<1xf32>
    %94 = vector.shape_cast %93 : vector<1xf32> to vector<1x1x1xf32>
    %95 = vector.extract %94[0, 0, 0] : f32 from vector<1x1x1xf32>
    %96 = vector.broadcast %95 : f32 to vector<1x1xf32>
    %cst_35 = arith.constant 0.001953125 : f32
    %97 = vector.broadcast %cst_35 : f32 to vector<1x1xf32>
    %98 = arith.mulf %96, %97 : vector<1x1xf32>
    %99 = vector.broadcast %98 : vector<1x1xf32> to vector<2x256xf32>
    %100 = arith.subf %89, %99 : vector<2x256xf32>
    %101 = arith.mulf %100, %100 : vector<2x256xf32>
    %102 = vector.shape_cast %101 : vector<2x256xf32> to vector<1x2x256xf32>
    %cst_36 = arith.constant dense<0.000000e+00> : vector<1xf32>
    %103 = vector.multi_reduction <add>, %102, %cst_36 [1, 2] : vector<1x2x256xf32> to vector<1xf32>
    %104 = vector.shape_cast %103 : vector<1xf32> to vector<1x1x1xf32>
    %105 = vector.extract %104[0, 0, 0] : f32 from vector<1x1x1xf32>
    %106 = vector.broadcast %105 : f32 to vector<1x1xf32>
    %cst_37 = arith.constant 0.001953125 : f32
    %107 = vector.broadcast %cst_37 : f32 to vector<1x1xf32>
    %108 = arith.mulf %106, %107 : vector<1x1xf32>
    %cst_38 = arith.constant 9.99999974E-6 : f32
    %109 = vector.broadcast %cst_38 : f32 to vector<1x1xf32>
    %110 = arith.addf %108, %109 : vector<1x1xf32>
    %111 = math.rsqrt %110 : vector<1x1xf32>
    %112 = arith.mulf %90, %111 : vector<1x1xf32>
    %113 = vector.broadcast %112 : vector<1x1xf32> to vector<2x256xf32>
    %114 = arith.mulf %100, %113 : vector<2x256xf32>
    %115 = vector.broadcast %91 : vector<1x1xf32> to vector<2x256xf32>
    %116 = arith.addf %114, %115 : vector<2x256xf32>
    %117 = arith.negf %116 : vector<2x256xf32>
    %118 = math.exp %117 : vector<2x256xf32>
    %cst_39 = arith.constant 1.000000e+00 : f32
    %119 = vector.broadcast %cst_39 : f32 to vector<2x256xf32>
    %120 = arith.addf %119, %118 : vector<2x256xf32>
    %121 = arith.divf %119, %120 : vector<2x256xf32>
    %122 = vector.extract_strided_slice %74 {offsets = [0, 0], sizes = [32, 256], strides = [1, 1]} : vector<32x512xf32> to vector<32x256xf32>
    %123 = vector.extract_strided_slice %121 {offsets = [0, 0], sizes = [1, 256], strides = [1, 1]} : vector<2x256xf32> to vector<1x256xf32>
    %124 = vector.broadcast %123 : vector<1x256xf32> to vector<32x256xf32>
    %125 = arith.mulf %122, %124 : vector<32x256xf32>
    %c0_40 = arith.constant 0 : index
    %c0_41 = arith.constant 0 : index
    %126 = vector.load %arg3[%c0_40, %c0_41] : memref<64x256xf32, #tpu.memory_space<vmem>>, vector<32x256xf32>
    tpu.vector_store %arg3[%c0_40, %c0_41], %125 {strides = array<i32>} : memref<64x256xf32, #tpu.memory_space<vmem>>, vector<32x256xf32>,
    %127 = vector.extract_strided_slice %74 {offsets = [0, 256], sizes = [32, 256], strides = [1, 1]} : vector<32x512xf32> to vector<32x256xf32>
    %128 = vector.extract_strided_slice %121 {offsets = [1, 0], sizes = [1, 256], strides = [1, 1]} : vector<2x256xf32> to vector<1x256xf32>
    %129 = vector.broadcast %128 : vector<1x256xf32> to vector<32x256xf32>
    %130 = arith.mulf %127, %129 : vector<32x256xf32>
    %c32 = arith.constant 32 : index
    %c0_42 = arith.constant 0 : index
    %131 = vector.load %arg3[%c32, %c0_42] : memref<64x256xf32, #tpu.memory_space<vmem>>, vector<32x256xf32>
    tpu.vector_store %arg3[%c32, %c0_42], %130 {strides = array<i32>} : memref<64x256xf32, #tpu.memory_space<vmem>>, vector<32x256xf32>,
    return
  }
}

</mosaic_0001>

<llo_original>
// kernel: block_forward.1
$region0: #{block_forward.1}
  #allocation0 [shape = 'u32[]', space=smem, size = 0x4, offset = 0x4, fixed_abs, tag = 'smem constant byte address 0x4 - core index']
  #allocation1 [shape = 'u32[72,128]{1,0:T(1,128)}', space=vmem, size = 0x9000, scoped, tag = 'internal scratch']
  %s0 = inlined_call_operand.vmem [shape: f32[36,512], index: 0, kind: input, shape index: {}]
  %s1 = inlined_call_operand.vmem [shape: f32[32,128], index: 1, kind: input, shape index: {}]
  %s2 = inlined_call_operand.vmem [shape: f32[512,256], index: 2, kind: input, shape index: {}]
  %s3 = inlined_call_operand.vmem [shape: f32[64,256], index: 3, kind: output, shape index: {}]
  %s4 = sld [smem:[#allocation0]]
  $region22: #{block_forward.1} parent=0
    _
  %s6 = ssub.s32 1, %s4
  %s7 = scalar_select 0, %s6, %s4
  // Predicated region
  $region2: #{block_forward.1} parent=0 // pred_check
    _
  $region3: #{block_forward.1} parent=0 // pred_check_branch
    %9 = sbr.rel (0) target = $region5
  $region4: #{block_forward.1} parent=0 // pred_region
    _
  $region5: #{block_forward.1} parent=0 // pred_fallthru
    _
  // Predicated region
  $region6: #{block_forward.1} parent=0 // pred_check
    _
  $region7: #{block_forward.1} parent=0 // pred_check_branch
    %11 = sbr.rel (0) target = $region9
  $region8: #{block_forward.1} parent=0 // pred_region
    _
  $region9: #{block_forward.1} parent=0 // pred_fallthru
    _
  // Predicated region
  $region10: #{block_forward.1} parent=0 // pred_check
    _
  $region11: #{block_forward.1} parent=0 // pred_check_branch
    %13 = sbr.rel (0) target = $region13
  $region12: #{block_forward.1} parent=0 // pred_region
    _
  $region13: #{block_forward.1} parent=0 // pred_fallthru
    _
  %v14 = vld [vmem:[%s0] sm:$0xff]
  %v15 = vld [vmem:[%s0 + $0x8] sm:$0xff]
  %v16 = vld [vmem:[%s0 + $0x10] sm:$0xff]
  %v17 = vld [vmem:[%s0 + $0x18] sm:$0xff]
  %v18 = vld [vmem:[%s0 + $0x20] sm:$0xff]
  %v19 = vld [vmem:[%s0 + $0x28] sm:$0xff]
  %v20 = vld [vmem:[%s0 + $0x30] sm:$0xff]
  %v21 = vld [vmem:[%s0 + $0x38] sm:$0xff]
  %v22 = vld [vmem:[%s0 + $0x40] sm:$0xff]
  %v23 = vld [vmem:[%s0 + $0x48] sm:$0xff]
  %v24 = vld [vmem:[%s0 + $0x50] sm:$0xff]
  %v25 = vld [vmem:[%s0 + $0x58] sm:$0xff]
  %v26 = vld [vmem:[%s0 + $0x60] sm:$0xff]
  %v27 = vld [vmem:[%s0 + $0x68] sm:$0xff]
  %v28 = vld [vmem:[%s0 + $0x70] sm:$0xff]
  %v29 = vld [vmem:[%s0 + $0x78] sm:$0xff]
  %v30 = vld [vmem:[%s0 + $0x80] sm:$0xf]
  %v31 = vld [vmem:[%s0 + $0x88] sm:$0xf]
  %v32 = vld [vmem:[%s0 + $0x90] sm:$0xf]
  %v33 = vld [vmem:[%s0 + $0x98] sm:$0xf]
  %vm34 = vcmp.gt.f32.partialorder %v14, 0.0
  %vm35 = vcmp.gt.f32.partialorder %v15, 0.0
  %vm36 = vcmp.gt.f32.partialorder %v16, 0.0
  %vm37 = vcmp.gt.f32.partialorder %v17, 0.0
  %vm38 = vcmp.gt.f32.partialorder %v18, 0.0
  %vm39 = vcmp.gt.f32.partialorder %v19, 0.0
  %vm40 = vcmp.gt.f32.partialorder %v20, 0.0
  %vm41 = vcmp.gt.f32.partialorder %v21, 0.0
  %vm42 = vcmp.gt.f32.partialorder %v22, 0.0
  %vm43 = vcmp.gt.f32.partialorder %v23, 0.0
  %vm44 = vcmp.gt.f32.partialorder %v24, 0.0
  %vm45 = vcmp.gt.f32.partialorder %v25, 0.0
  %vm46 = vcmp.gt.f32.partialorder %v26, 0.0
  %vm47 = vcmp.gt.f32.partialorder %v27, 0.0
  %vm48 = vcmp.gt.f32.partialorder %v28, 0.0
  %vm49 = vcmp.gt.f32.partialorder %v29, 0.0
  %vm50 = vcmp.gt.f32.partialorder %v30, 0.0
  %vm51 = vcmp.gt.f32.partialorder %v31, 0.0
  %vm52 = vcmp.gt.f32.partialorder %v32, 0.0
  %vm53 = vcmp.gt.f32.partialorder %v33, 0.0
  %v54 = vmul.f32 %v14, 0.2
  %v55 = vmul.f32 %v15, 0.2
  %v56 = vmul.f32 %v16, 0.2
  %v57 = vmul.f32 %v17, 0.2
  %v58 = vmul.f32 %v18, 0.2
  %v59 = vmul.f32 %v19, 0.2
  %v60 = vmul.f32 %v20, 0.2
  %v61 = vmul.f32 %v21, 0.2
  %v62 = vmul.f32 %v22, 0.2
  %v63 = vmul.f32 %v23, 0.2
  %v64 = vmul.f32 %v24, 0.2
  %v65 = vmul.f32 %v25, 0.2
  %v66 = vmul.f32 %v26, 0.2
  %v67 = vmul.f32 %v27, 0.2
  %v68 = vmul.f32 %v28, 0.2
  %v69 = vmul.f32 %v29, 0.2
  %v70 = vmul.f32 %v30, 0.2
  %v71 = vmul.f32 %v31, 0.2
  %v72 = vmul.f32 %v32, 0.2
  %v73 = vmul.f32 %v33, 0.2
  %v74 = vsel %vm34, %v14, %v54
  %v75 = vsel %vm35, %v15, %v55
  %v76 = vsel %vm36, %v16, %v56
  %v77 = vsel %vm37, %v17, %v57
  %v78 = vsel %vm38, %v18, %v58
  %v79 = vsel %vm39, %v19, %v59
  %v80 = vsel %vm40, %v20, %v60
  %v81 = vsel %vm41, %v21, %v61
  %v82 = vsel %vm42, %v22, %v62
  %v83 = vsel %vm43, %v23, %v63
  %v84 = vsel %vm44, %v24, %v64
  %v85 = vsel %vm45, %v25, %v65
  %v86 = vsel %vm46, %v26, %v66
  %v87 = vsel %vm47, %v27, %v67
  %v88 = vsel %vm48, %v28, %v68
  %v89 = vsel %vm49, %v29, %v69
  %v90 = vsel %vm50, %v30, %v70
  %v91 = vsel %vm51, %v31, %v71
  %v92 = vsel %vm52, %v32, %v72
  %v93 = vsel %vm53, %v33, %v73
  %v94 = vld [vmem:[%s1] sm:$0xff]
  %v95 = vld [vmem:[%s1 + $0x8] sm:$0xff]
  %v96 = vld [vmem:[%s1 + $0x10] sm:$0xff]
  %v97 = vld [vmem:[%s1 + $0x18] sm:$0xff]
  %vm98 = vcmask 293888
  %v100 = vsel %vm98, %v94, 0
  %v103 = vsel %vm98, %v95, 0
  %v106 = vsel %vm98, %v96, 0
  %v109 = vsel %vm98, %v97, 0
  %vm111 = vcmask 1043456
  %v113 = vsel %vm111, %v90, 0
  %v116 = vsel %vm111, %v91, 0
  %v119 = vsel %vm111, %v92, 0
  %v122 = vsel %vm111, %v93, 0
  %124 = vmatpush.msra.mxu0 0.0
  %125 = vmatpush.msra.mxu0 0.0
  %126 = vmatpush.msra.mxu0 0.0
  %127 = vmatpush.msra.mxu0 0.0
  %128 = vmatpush.msra.mxu0 0.0
  %129 = vmatpush.msra.mxu0 0.0
  %130 = vmatpush.msra.mxu0 0.0
  %131 = vmatpush.msra.mxu0 0.0
  %132 = vmatpush.msra.mxu0 0.0
  %133 = vmatpush.msra.mxu0 0.0
  %134 = vmatpush.msra.mxu0 0.0
  %135 = vmatpush.msra.mxu0 %v113
  %136 = vmatpush.msra.mxu0 %v86
  %137 = vmatpush.msra.mxu0 %v82
  %138 = vmatpush.msra.mxu0 %v78
  %139 = vmatpush.msra.mxu0 %v74
  %140 = vmatmul.f32.gmra.mxu0 %v100
  %v141 = vpop.f32.mrf.mxu0
  %v142 = vadd.f32 0.0, %v141
  %143 = vmatmul.f32.gmra.mxu0 %v103
  %v144 = vpop.f32.mrf.mxu0
  %v145 = vadd.f32 0.0, %v144
  %146 = vmatmul.f32.gmra.mxu0 %v106
  %v147 = vpop.f32.mrf.mxu0
  %v148 = vadd.f32 0.0, %v147
  %149 = vmatmul.f32.gmra.mxu0 %v109
  %v150 = vpop.f32.mrf.mxu0
  %v151 = vadd.f32 0.0, %v150
  %152 = vdwg.mxu0
  %153 = vmatpush.msra.mxu0 0.0
  %154 = vmatpush.msra.mxu0 0.0
  %155 = vmatpush.msra.mxu0 0.0
  %156 = vmatpush.msra.mxu0 0.0
  %157 = vmatpush.msra.mxu0 0.0
  %158 = vmatpush.msra.mxu0 0.0
  %159 = vmatpush.msra.mxu0 0.0
  %160 = vmatpush.msra.mxu0 0.0
  %161 = vmatpush.msra.mxu0 0.0
  %162 = vmatpush.msra.mxu0 0.0
  %163 = vmatpush.msra.mxu0 0.0
  %164 = vmatpush.msra.mxu0 %v116
  %165 = vmatpush.msra.mxu0 %v87
  %166 = vmatpush.msra.mxu0 %v83
  %167 = vmatpush.msra.mxu0 %v79
  %168 = vmatpush.msra.mxu0 %v75
  %169 = vmatmul.f32.gmra.mxu0 %v100
  %v170 = vpop.f32.mrf.mxu0
  %v171 = vadd.f32 0.0, %v170
  %172 = vmatmul.f32.gmra.mxu0 %v103
  %v173 = vpop.f32.mrf.mxu0
  %v174 = vadd.f32 0.0, %v173
  %175 = vmatmul.f32.gmra.mxu0 %v106
  %v176 = vpop.f32.mrf.mxu0
  %v177 = vadd.f32 0.0, %v176
  %178 = vmatmul.f32.gmra.mxu0 %v109
  %v179 = vpop.f32.mrf.mxu0
  %v180 = vadd.f32 0.0, %v179
  %181 = vdwg.mxu0
  %182 = vmatpush.msra.mxu0 0.0
  %183 = vmatpush.msra.mxu0 0.0
  %184 = vmatpush.msra.mxu0 0.0
  %185 = vmatpush.msra.mxu0 0.0
  %186 = vmatpush.msra.mxu0 0.0
  %187 = vmatpush.msra.mxu0 0.0
  %188 = vmatpush.msra.mxu0 0.0
  %189 = vmatpush.msra.mxu0 0.0
  %190 = vmatpush.msra.mxu0 0.0
  %191 = vmatpush.msra.mxu0 0.0
  %192 = vmatpush.msra.mxu0 0.0
  %193 = vmatpush.msra.mxu0 %v119
  %194 = vmatpush.msra.mxu0 %v88
  %195 = vmatpush.msra.mxu0 %v84
  %196 = vmatpush.msra.mxu0 %v80
  %197 = vmatpush.msra.mxu0 %v76
  %198 = vmatmul.f32.gmra.mxu0 %v100
  %v199 = vpop.f32.mrf.mxu0
  %v200 = vadd.f32 0.0, %v199
  %201 = vmatmul.f32.gmra.mxu0 %v103
  %v202 = vpop.f32.mrf.mxu0
  %v203 = vadd.f32 0.0, %v202
  %204 = vmatmul.f32.gmra.mxu0 %v106
  %v205 = vpop.f32.mrf.mxu0
  %v206 = vadd.f32 0.0, %v205
  %207 = vmatmul.f32.gmra.mxu0 %v109
  %v208 = vpop.f32.mrf.mxu0
  %v209 = vadd.f32 0.0, %v208
  %210 = vdwg.mxu0
  %211 = vmatpush.msra.mxu0 0.0
  %212 = vmatpush.msra.mxu0 0.0
  %213 = vmatpush.msra.mxu0 0.0
  %214 = vmatpush.msra.mxu0 0.0
  %215 = vmatpush.msra.mxu0 0.0
  %216 = vmatpush.msra.mxu0 0.0
  %217 = vmatpush.msra.mxu0 0.0
  %218 = vmatpush.msra.mxu0 0.0
  %219 = vmatpush.msra.mxu0 0.0
  %220 = vmatpush.msra.mxu0 0.0
  %221 = vmatpush.msra.mxu0 0.0
  %222 = vmatpush.msra.mxu0 %v122
  %223 = vmatpush.msra.mxu0 %v89
  %224 = vmatpush.msra.mxu0 %v85
  %225 = vmatpush.msra.mxu0 %v81
  %226 = vmatpush.msra.mxu0 %v77
  %227 = vmatmul.f32.gmra.mxu0 %v100
  %v228 = vpop.f32.mrf.mxu0
  %v229 = vadd.f32 0.0, %v228
  %230 = vmatmul.f32.gmra.mxu0 %v103
  %v231 = vpop.f32.mrf.mxu0
  %v232 = vadd.f32 0.0, %v231
  %233 = vmatmul.f32.gmra.mxu0 %v106
  %v234 = vpop.f32.mrf.mxu0
  %v235 = vadd.f32 0.0, %v234
  %236 = vmatmul.f32.gmra.mxu0 %v109
  %v237 = vpop.f32.mrf.mxu0
  %v238 = vadd.f32 0.0, %v237
  %239 = vdwg.mxu0
  %v240 = vadd.f32 %v142, %v171
  %v241 = vadd.f32 %v240, %v200
  %v242 = vadd.f32 %v241, %v229
  %243 = vadd.xlane.f32.xlu0 %v242
  %v244 = vpop.xlane.xlu0 %243
  %v245 = vadd.f32 %v145, %v174
  %v246 = vadd.f32 %v245, %v203
  %v247 = vadd.f32 %v246, %v232
  %248 = vadd.xlane.f32.xlu0 %v247
  %v249 = vpop.xlane.xlu0 %248
  %v250 = vadd.f32 %v148, %v177
  %v251 = vadd.f32 %v250, %v206
  %v252 = vadd.f32 %v251, %v235
  %253 = vadd.xlane.f32.xlu0 %v252
  %v254 = vpop.xlane.xlu0 %253
  %v255 = vadd.f32 %v151, %v180
  %v256 = vadd.f32 %v255, %v209
  %v257 = vadd.f32 %v256, %v238
  %258 = vadd.xlane.f32.xlu0 %v257
  %v259 = vpop.xlane.xlu0 %258
  %v260 = vmul.f32 %v244, 0.001953125
  %v261 = vmul.f32 %v249, 0.001953125
  %v262 = vmul.f32 %v254, 0.001953125
  %v263 = vmul.f32 %v259, 0.001953125
  %v264 = vsub.f32 %v142, %v260
  %v265 = vsub.f32 %v171, %v260
  %v266 = vsub.f32 %v200, %v260
  %v267 = vsub.f32 %v229, %v260
  %v268 = vsub.f32 %v145, %v261
  %v269 = vsub.f32 %v174, %v261
  %v270 = vsub.f32 %v203, %v261
  %v271 = vsub.f32 %v232, %v261
  %v272 = vsub.f32 %v148, %v262
  %v273 = vsub.f32 %v177, %v262
  %v274 = vsub.f32 %v206, %v262
  %v275 = vsub.f32 %v235, %v262
  %v276 = vsub.f32 %v151, %v263
  %v277 = vsub.f32 %v180, %v263
  %v278 = vsub.f32 %v209, %v263
  %v279 = vsub.f32 %v238, %v263
  %v280 = vmul.f32 %v264, %v264
  %v281 = vmul.f32 %v265, %v265
  %v282 = vmul.f32 %v266, %v266
  %v283 = vmul.f32 %v267, %v267
  %v284 = vmul.f32 %v268, %v268
  %v285 = vmul.f32 %v269, %v269
  %v286 = vmul.f32 %v270, %v270
  %v287 = vmul.f32 %v271, %v271
  %v288 = vmul.f32 %v272, %v272
  %v289 = vmul.f32 %v273, %v273
  %v290 = vmul.f32 %v274, %v274
  %v291 = vmul.f32 %v275, %v275
  %v292 = vmul.f32 %v276, %v276
  %v293 = vmul.f32 %v277, %v277
  %v294 = vmul.f32 %v278, %v278
  %v295 = vmul.f32 %v279, %v279
  %v296 = vadd.f32 %v280, %v281
  %v297 = vadd.f32 %v296, %v282
  %v298 = vadd.f32 %v297, %v283
  %299 = vadd.xlane.f32.xlu0 %v298
  %v300 = vpop.xlane.xlu0 %299
  %v301 = vadd.f32 %v284, %v285
  %v302 = vadd.f32 %v301, %v286
  %v303 = vadd.f32 %v302, %v287
  %304 = vadd.xlane.f32.xlu0 %v303
  %v305 = vpop.xlane.xlu0 %304
  %v306 = vadd.f32 %v288, %v289
  %v307 = vadd.f32 %v306, %v290
  %v308 = vadd.f32 %v307, %v291
  %309 = vadd.xlane.f32.xlu0 %v308
  %v310 = vpop.xlane.xlu0 %309
  %v311 = vadd.f32 %v292, %v293
  %v312 = vadd.f32 %v311, %v294
  %v313 = vadd.f32 %v312, %v295
  %314 = vadd.xlane.f32.xlu0 %v313
  %v315 = vpop.xlane.xlu0 %314
  %v316 = vmul.f32 %v300, 0.001953125
  %v317 = vmul.f32 %v305, 0.001953125
  %v318 = vmul.f32 %v310, 0.001953125
  %v319 = vmul.f32 %v315, 0.001953125
  %v320 = vadd.f32 %v316, 1e-05
  %v321 = vadd.f32 %v317, 1e-05
  %v322 = vadd.f32 %v318, 1e-05
  %v323 = vadd.f32 %v319, 1e-05
  %v324 = vrsqrt.pop %v320
  %v325 = vmul.f32 %v324, %v320
  %v326 = vmul.f32 %v325, %v324
  %v327 = vmul.f32 0.5, %v326
  %v328 = vsub.f32 1.5, %v327
  %v329 = vmul.f32 %v324, %v328
  %vm330 = vweird.f32 %v320
  %vm331 = vweird.f32 %v324
  %vm332 = vmor %vm330, %vm331
  %v333 = vsel %vm332, %v324, %v329
  %v334 = vrsqrt.pop %v321
  %v335 = vmul.f32 %v334, %v321
  %v336 = vmul.f32 %v335, %v334
  %v337 = vmul.f32 0.5, %v336
  %v338 = vsub.f32 1.5, %v337
  %v339 = vmul.f32 %v334, %v338
  %vm340 = vweird.f32 %v321
  %vm341 = vweird.f32 %v334
  %vm342 = vmor %vm340, %vm341
  %v343 = vsel %vm342, %v334, %v339
  %v344 = vrsqrt.pop %v322
  %v345 = vmul.f32 %v344, %v322
  %v346 = vmul.f32 %v345, %v344
  %v347 = vmul.f32 0.5, %v346
  %v348 = vsub.f32 1.5, %v347
  %v349 = vmul.f32 %v344, %v348
  %vm350 = vweird.f32 %v322
  %vm351 = vweird.f32 %v344
  %vm352 = vmor %vm350, %vm351
  %v353 = vsel %vm352, %v344, %v349
  %v354 = vrsqrt.pop %v323
  %v355 = vmul.f32 %v354, %v323
  %v356 = vmul.f32 %v355, %v354
  %v357 = vmul.f32 0.5, %v356
  %v358 = vsub.f32 1.5, %v357
  %v359 = vmul.f32 %v354, %v358
  %vm360 = vweird.f32 %v323
  %vm361 = vweird.f32 %v354
  %vm362 = vmor %vm360, %vm361
  %v363 = vsel %vm362, %v354, %v359
  %v364 = vmul.f32 %v94, %v333
  %v365 = vmul.f32 %v95, %v343
  %v366 = vmul.f32 %v96, %v353
  %v367 = vmul.f32 %v97, %v363
  %369 = vset.pattern.permute.xlu0 36
  %370 = vperm.xlu0 %369, %v364
  %v371 = vpop.permute.xlu0 %370
  %374 = vset.pattern.permute.xlu0 36
  %375 = vperm.xlu0 %374, %v365
  %v376 = vpop.permute.xlu0 %375
  %379 = vset.pattern.permute.xlu0 36
  %380 = vperm.xlu0 %379, %v366
  %v381 = vpop.permute.xlu0 %380
  %384 = vset.pattern.permute.xlu0 36
  %385 = vperm.xlu0 %384, %v367
  %v386 = vpop.permute.xlu0 %385
  %v388 = vmul.f32 %v264, %v371
  %v389 = vmul.f32 %v265, %v371
  %v390 = vmul.f32 %v266, %v371
  %v391 = vmul.f32 %v267, %v371
  %v392 = vmul.f32 %v268, %v376
  %v393 = vmul.f32 %v269, %v376
  %v394 = vmul.f32 %v270, %v376
  %v395 = vmul.f32 %v271, %v376
  %v396 = vmul.f32 %v272, %v381
  %v397 = vmul.f32 %v273, %v381
  %v398 = vmul.f32 %v274, %v381
  %v399 = vmul.f32 %v275, %v381
  %v400 = vmul.f32 %v276, %v386
  %v401 = vmul.f32 %v277, %v386
  %v402 = vmul.f32 %v278, %v386
  %v403 = vmul.f32 %v279, %v386
  %404 = vset.pattern.permute.xlu0 37
  %405 = vperm.xlu0 %404, %v94
  %v406 = vpop.permute.xlu0 %405
  %408 = vset.pattern.permute.xlu0 37
  %409 = vperm.xlu0 %408, %v95
  %v410 = vpop.permute.xlu0 %409
  %412 = vset.pattern.permute.xlu0 37
  %413 = vperm.xlu0 %412, %v96
  %v414 = vpop.permute.xlu0 %413
  %416 = vset.pattern.permute.xlu0 37
  %417 = vperm.xlu0 %416, %v97
  %v418 = vpop.permute.xlu0 %417
  %v420 = vadd.f32 %v388, %v406
  %v421 = vadd.f32 %v389, %v406
  %v422 = vadd.f32 %v390, %v406
  %v423 = vadd.f32 %v391, %v406
  %v424 = vadd.f32 %v392, %v410
  %v425 = vadd.f32 %v393, %v410
  %v426 = vadd.f32 %v394, %v410
  %v427 = vadd.f32 %v395, %v410
  %v428 = vadd.f32 %v396, %v414
  %v429 = vadd.f32 %v397, %v414
  %v430 = vadd.f32 %v398, %v414
  %v431 = vadd.f32 %v399, %v414
  %v432 = vadd.f32 %v400, %v418
  %v433 = vadd.f32 %v401, %v418
  %v434 = vadd.f32 %v402, %v418
  %v435 = vadd.f32 %v403, %v418
  %v436 = vadd.f32 %v420, %v421
  %437 = vadd.xlane.f32.xlu0 %v436
  %v438 = vpop.xlane.xlu0 %437
  %v439 = vadd.f32 %v424, %v425
  %440 = vadd.xlane.f32.xlu0 %v439
  %v441 = vpop.xlane.xlu0 %440
  %v442 = vadd.f32 %v428, %v429
  %443 = vadd.xlane.f32.xlu0 %v442
  %v444 = vpop.xlane.xlu0 %443
  %v445 = vadd.f32 %v432, %v433
  %446 = vadd.xlane.f32.xlu0 %v445
  %v447 = vpop.xlane.xlu0 %446
  %v448 = vmul.f32 %v438, 0.00390625
  %v449 = vmul.f32 %v441, 0.00390625
  %v450 = vmul.f32 %v444, 0.00390625
  %v451 = vmul.f32 %v447, 0.00390625
  %v452 = vadd.f32 %v422, %v423
  %453 = vadd.xlane.f32.xlu0 %v452
  %v454 = vpop.xlane.xlu0 %453
  %v455 = vadd.f32 %v426, %v427
  %456 = vadd.xlane.f32.xlu0 %v455
  %v457 = vpop.xlane.xlu0 %456
  %v458 = vadd.f32 %v430, %v431
  %459 = vadd.xlane.f32.xlu0 %v458
  %v460 = vpop.xlane.xlu0 %459
  %v461 = vadd.f32 %v434, %v435
  %462 = vadd.xlane.f32.xlu0 %v461
  %v463 = vpop.xlane.xlu0 %462
  %v464 = vmul.f32 %v454, 0.00390625
  %v465 = vmul.f32 %v457, 0.00390625
  %v466 = vmul.f32 %v460, 0.00390625
  %v467 = vmul.f32 %v463, 0.00390625
  %v468 = vmax.f32 %v420, %v421
  %469 = vmax.xlane.f32.xlu0 %v468
  %v470 = vpop.xlane.xlu0 %469
  %v471 = vmax.f32 %v424, %v425
  %472 = vmax.xlane.f32.xlu0 %v471
  %v473 = vpop.xlane.xlu0 %472
  %v474 = vmax.f32 %v428, %v429
  %475 = vmax.xlane.f32.xlu0 %v474
  %v476 = vpop.xlane.xlu0 %475
  %v477 = vmax.f32 %v432, %v433
  %478 = vmax.xlane.f32.xlu0 %v477
  %v479 = vpop.xlane.xlu0 %478
  %v480 = vmax.f32 %v422, %v423
  %481 = vmax.xlane.f32.xlu0 %v480
  %v482 = vpop.xlane.xlu0 %481
  %v483 = vmax.f32 %v426, %v427
  %484 = vmax.xlane.f32.xlu0 %v483
  %v485 = vpop.xlane.xlu0 %484
  %v486 = vmax.f32 %v430, %v431
  %487 = vmax.xlane.f32.xlu0 %v486
  %v488 = vpop.xlane.xlu0 %487
  %v489 = vmax.f32 %v434, %v435
  %490 = vmax.xlane.f32.xlu0 %v489
  %v491 = vpop.xlane.xlu0 %490
  %vm492 = vcmask 7168
  %v493 = vsel %vm492, %v448, %v464
  %v494 = vsel %vm492, %v449, %v465
  %v495 = vsel %vm492, %v450, %v466
  %v496 = vsel %vm492, %v451, %v467
  %vm497 = vcmask 15360
  %v498 = vsel %vm497, %v493, %v470
  %v499 = vsel %vm497, %v494, %v473
  %v500 = vsel %vm497, %v495, %v476
  %v501 = vsel %vm497, %v496, %v479
  %vm502 = vcmask 23552
  %v503 = vsel %vm502, %v498, %v482
  %v504 = vsel %vm502, %v499, %v485
  %v505 = vsel %vm502, %v500, %v488
  %v506 = vsel %vm502, %v501, %v491
  %v507 = vld [vmem:[%s1] sm:$0x3]
  %509 = vset.pattern.permute.xlu0 73
  %510 = vperm.xlu0 %509, %v507
  %v511 = vpop.permute.xlu0 %510
  %513 = vrot.lane.b32.xlu0 %v507, 87
  %v514 = vpop.permute.xlu0 %513
  %vm515 = vcmask 261120
  %v516 = vsel %vm515, %v514, 0
  %518 = vmatpush.msra.mxu0 0.0
  %519 = vmatpush.msra.mxu0 0.0
  %520 = vmatpush.msra.mxu0 0.0
  %521 = vmatpush.msra.mxu0 0.0
  %522 = vmatpush.msra.mxu0 0.0
  %523 = vmatpush.msra.mxu0 0.0
  %524 = vmatpush.msra.mxu0 0.0
  %525 = vmatpush.msra.mxu0 0.0
  %526 = vmatpush.msra.mxu0 0.0
  %527 = vmatpush.msra.mxu0 0.0
  %528 = vmatpush.msra.mxu0 0.0
  %529 = vmatpush.msra.mxu0 0.0
  %530 = vmatpush.msra.mxu0 %v506
  %531 = vmatpush.msra.mxu0 %v505
  %532 = vmatpush.msra.mxu0 %v504
  %533 = vmatpush.msra.mxu0 %v503
  %534 = vmatmul.f32.gmra.mxu0 %v516
  %v535 = vpop.f32.mrf.mxu0
  %v536 = vadd.f32 %v511, %v535
  %537 = vdwg.mxu0
  %v538 = vmax.f32 %v536, 0.0
  %539 = vset.pattern.permute.xlu0 40
  %540 = vperm.xlu0 %539, %v94
  %v541 = vpop.permute.xlu0 %540
  %543 = vset.pattern.permute.xlu0 40
  %544 = vperm.xlu0 %543, %v95
  %v545 = vpop.permute.xlu0 %544
  %547 = vset.pattern.permute.xlu0 40
  %548 = vperm.xlu0 %547, %v96
  %v549 = vpop.permute.xlu0 %548
  %551 = vset.pattern.permute.xlu0 40
  %552 = vperm.xlu0 %551, %v97
  %v553 = vpop.permute.xlu0 %552
  %555 = vrot.lane.b32.xlu0 %v94, 90
  %v556 = vpop.permute.xlu0 %555
  %557 = vrot.lane.b32.xlu0 %v95, 90
  %v558 = vpop.permute.xlu0 %557
  %559 = vrot.lane.b32.xlu0 %v96, 90
  %v560 = vpop.permute.xlu0 %559
  %561 = vrot.lane.b32.xlu0 %v97, 90
  %v562 = vpop.permute.xlu0 %561
  %v563 = vsel %vm497, %v556, 0
  %v565 = vsel %vm497, %v558, 0
  %v567 = vsel %vm497, %v560, 0
  %v569 = vsel %vm497, %v562, 0
  %vm571 = vcmask 1041408
  %v573 = vsel %vm571, %v538, 0
  %575 = vmatpush.msra.mxu0 0.0
  %576 = vmatpush.msra.mxu0 0.0
  %577 = vmatpush.msra.mxu0 0.0
  %578 = vmatpush.msra.mxu0 0.0
  %579 = vmatpush.msra.mxu0 0.0
  %580 = vmatpush.msra.mxu0 0.0
  %581 = vmatpush.msra.mxu0 0.0
  %582 = vmatpush.msra.mxu0 0.0
  %583 = vmatpush.msra.mxu0 0.0
  %584 = vmatpush.msra.mxu0 0.0
  %585 = vmatpush.msra.mxu0 0.0
  %586 = vmatpush.msra.mxu0 0.0
  %587 = vmatpush.msra.mxu0 0.0
  %588 = vmatpush.msra.mxu0 0.0
  %589 = vmatpush.msra.mxu0 0.0
  %590 = vmatpush.msra.mxu0 %v573
  %591 = vmatmul.f32.gmra.mxu0 %v563
  %v592 = vpop.f32.mrf.mxu0
  %v593 = vadd.f32 %v541, %v592
  %594 = vmatmul.f32.gmra.mxu0 %v565
  %v595 = vpop.f32.mrf.mxu0
  %v596 = vadd.f32 %v545, %v595
  %597 = vmatmul.f32.gmra.mxu0 %v567
  %v598 = vpop.f32.mrf.mxu0
  %v599 = vadd.f32 %v549, %v598
  %600 = vmatmul.f32.gmra.mxu0 %v569
  %v601 = vpop.f32.mrf.mxu0
  %v602 = vadd.f32 %v553, %v601
  %603 = vdwg.mxu0
  %608 = vrot.lane.b32.xlu0 %v593, 126
  %v609 = vpop.permute.xlu0 %608
  %610 = vrot.lane.b32.xlu0 %v596, 126
  %v611 = vpop.permute.xlu0 %610
  %612 = vrot.lane.b32.xlu0 %v599, 126
  %v613 = vpop.permute.xlu0 %612
  %614 = vrot.lane.b32.xlu0 %v602, 126
  %v615 = vpop.permute.xlu0 %614
  %v620 = vadd.f32 %v593, %v609
  %v621 = vadd.f32 %v596, %v611
  %v622 = vadd.f32 %v599, %v613
  %v623 = vadd.f32 %v602, %v615
  %v624 = vxor.u32 %v620, 2147483648
  %v625 = vxor.u32 %v621, 2147483648
  %v626 = vxor.u32 %v622, 2147483648
  %v627 = vxor.u32 %v623, 2147483648
  %v628 = vmul.f32 %v624, 1.442695
  %v629 = vpow.pop %v628
  %v630 = vmul.f32 %v625, 1.442695
  %v631 = vpow.pop %v630
  %v632 = vmul.f32 %v626, 1.442695
  %v633 = vpow.pop %v632
  %v634 = vmul.f32 %v627, 1.442695
  %v635 = vpow.pop %v634
  %v636 = vadd.f32 %v629, 1.0
  %v637 = vadd.f32 %v631, 1.0
  %v638 = vadd.f32 %v633, 1.0
  %v639 = vadd.f32 %v635, 1.0
  %v640 = vrcp.pop %v636
  %v641 = vmul.f32 %v636, %v640
  %v642 = vsub.f32 1.0, %v641
  %v643 = vmul.f32 %v640, %v642
  %v644 = vadd.f32 %v640, %v643
  %vm645 = vweird.f32 %v636
  %vm646 = vweird.f32 %v640
  %vm647 = vmor %vm645, %vm646
  %v648 = vsel %vm647, %v640, %v644
  %v649 = vand.u32 2147483647, %v636
  %vm650 = vcmp.eq.f32.partialorder %v649, 8.507059e+37
  %v651 = vand.u32 %v636, 2147483648
  %v652 = vor.u32 1.1754944e-38, %v651
  %v653 = vsel %vm650, %v652, %v648
  %v654 = vmul.f32 1.0, %v653
  %v655 = vrcp.pop %v637
  %v656 = vmul.f32 %v637, %v655
  %v657 = vsub.f32 1.0, %v656
  %v658 = vmul.f32 %v655, %v657
  %v659 = vadd.f32 %v655, %v658
  %vm660 = vweird.f32 %v637
  %vm661 = vweird.f32 %v655
  %vm662 = vmor %vm660, %vm661
  %v663 = vsel %vm662, %v655, %v659
  %v664 = vand.u32 2147483647, %v637
  %vm665 = vcmp.eq.f32.partialorder %v664, 8.507059e+37
  %v666 = vand.u32 %v637, 2147483648
  %v667 = vor.u32 1.1754944e-38, %v666
  %v668 = vsel %vm665, %v667, %v663
  %v669 = vmul.f32 1.0, %v668
  %v670 = vrcp.pop %v638
  %v671 = vmul.f32 %v638, %v670
  %v672 = vsub.f32 1.0, %v671
  %v673 = vmul.f32 %v670, %v672
  %v674 = vadd.f32 %v670, %v673
  %vm675 = vweird.f32 %v638
  %vm676 = vweird.f32 %v670
  %vm677 = vmor %vm675, %vm676
  %v678 = vsel %vm677, %v670, %v674
  %v679 = vand.u32 2147483647, %v638
  %vm680 = vcmp.eq.f32.partialorder %v679, 8.507059e+37
  %v681 = vand.u32 %v638, 2147483648
  %v682 = vor.u32 1.1754944e-38, %v681
  %v683 = vsel %vm680, %v682, %v678
  %v684 = vmul.f32 1.0, %v683
  %v685 = vrcp.pop %v639
  %v686 = vmul.f32 %v639, %v685
  %v687 = vsub.f32 1.0, %v686
  %v688 = vmul.f32 %v685, %v687
  %v689 = vadd.f32 %v685, %v688
  %vm690 = vweird.f32 %v639
  %vm691 = vweird.f32 %v685
  %vm692 = vmor %vm690, %vm691
  %v693 = vsel %vm692, %v685, %v689
  %v694 = vand.u32 2147483647, %v639
  %vm695 = vcmp.eq.f32.partialorder %v694, 8.507059e+37
  %v696 = vand.u32 %v639, 2147483648
  %v697 = vor.u32 1.1754944e-38, %v696
  %v698 = vsel %vm695, %v697, %v693
  %v699 = vmul.f32 1.0, %v698
  %701 = vset.pattern.permute.xlu0 0
  %702 = vperm.xlu0 %701, %v654
  %v703 = vpop.permute.xlu0 %702
  %706 = vset.pattern.permute.xlu0 0
  %707 = vperm.xlu0 %706, %v669
  %v708 = vpop.permute.xlu0 %707
  %711 = vset.pattern.permute.xlu0 0
  %712 = vperm.xlu0 %711, %v684
  %v713 = vpop.permute.xlu0 %712
  %716 = vset.pattern.permute.xlu0 0
  %717 = vperm.xlu0 %716, %v699
  %v718 = vpop.permute.xlu0 %717
  %v720 = vmul.f32 %v420, %v703
  %v721 = vmul.f32 %v421, %v703
  %v722 = vmul.f32 %v424, %v708
  %v723 = vmul.f32 %v425, %v708
  %v724 = vmul.f32 %v428, %v713
  %v725 = vmul.f32 %v429, %v713
  %v726 = vmul.f32 %v432, %v718
  %v727 = vmul.f32 %v433, %v718
  %728 = vset.pattern.permute.xlu0 1
  %729 = vperm.xlu0 %728, %v654
  %v730 = vpop.permute.xlu0 %729
  %732 = vset.pattern.permute.xlu0 1
  %733 = vperm.xlu0 %732, %v669
  %v734 = vpop.permute.xlu0 %733
  %736 = vset.pattern.permute.xlu0 1
  %737 = vperm.xlu0 %736, %v684
  %v738 = vpop.permute.xlu0 %737
  %740 = vset.pattern.permute.xlu0 1
  %741 = vperm.xlu0 %740, %v699
  %v742 = vpop.permute.xlu0 %741
  %v744 = vmul.f32 %v422, %v730
  %v745 = vmul.f32 %v423, %v730
  %v746 = vmul.f32 %v426, %v734
  %v747 = vmul.f32 %v427, %v734
  %v748 = vmul.f32 %v430, %v738
  %v749 = vmul.f32 %v431, %v738
  %v750 = vmul.f32 %v434, %v742
  %v751 = vmul.f32 %v435, %v742
  %v752 = vmax.f32 %v720, %v722
  %v753 = vmax.f32 %v752, %v724
  %v754 = vmax.f32 %v753, %v726
  %v755 = vrot.slane %v754, 4
  %v756 = vmax.f32 %v754, %v755
  %v757 = vrot.slane %v756, 2
  %v758 = vmax.f32 %v756, %v757
  %v759 = vrot.slane %v758, 1
  %v760 = vmax.f32 %v758, %v759
  %v761 = vmax.f32 %v721, %v723
  %v762 = vmax.f32 %v761, %v725
  %v763 = vmax.f32 %v762, %v727
  %v764 = vrot.slane %v763, 4
  %v765 = vmax.f32 %v763, %v764
  %v766 = vrot.slane %v765, 2
  %v767 = vmax.f32 %v765, %v766
  %v768 = vrot.slane %v767, 1
  %v769 = vmax.f32 %v767, %v768
  %v770 = vmax.f32 %v744, %v746
  %v771 = vmax.f32 %v770, %v748
  %v772 = vmax.f32 %v771, %v750
  %v773 = vrot.slane %v772, 4
  %v774 = vmax.f32 %v772, %v773
  %v775 = vrot.slane %v774, 2
  %v776 = vmax.f32 %v774, %v775
  %v777 = vrot.slane %v776, 1
  %v778 = vmax.f32 %v776, %v777
  %v779 = vmax.f32 %v745, %v747
  %v780 = vmax.f32 %v779, %v749
  %v781 = vmax.f32 %v780, %v751
  %v782 = vrot.slane %v781, 4
  %v783 = vmax.f32 %v781, %v782
  %v784 = vrot.slane %v783, 2
  %v785 = vmax.f32 %v783, %v784
  %v786 = vrot.slane %v785, 1
  %v787 = vmax.f32 %v785, %v786
  %v788 = vadd.f32 %v720, %v722
  %v789 = vadd.f32 %v788, %v724
  %v790 = vadd.f32 %v789, %v726
  %v791 = vrot.slane %v790, 4
  %v792 = vadd.f32 %v790, %v791
  %v793 = vrot.slane %v792, 2
  %v794 = vadd.f32 %v792, %v793
  %v795 = vrot.slane %v794, 1
  %v796 = vadd.f32 %v794, %v795
  %v797 = vadd.f32 %v721, %v723
  %v798 = vadd.f32 %v797, %v725
  %v799 = vadd.f32 %v798, %v727
  %v800 = vrot.slane %v799, 4
  %v801 = vadd.f32 %v799, %v800
  %v802 = vrot.slane %v801, 2
  %v803 = vadd.f32 %v801, %v802
  %v804 = vrot.slane %v803, 1
  %v805 = vadd.f32 %v803, %v804
  %v806 = vadd.f32 %v744, %v746
  %v807 = vadd.f32 %v806, %v748
  %v808 = vadd.f32 %v807, %v750
  %v809 = vrot.slane %v808, 4
  %v810 = vadd.f32 %v808, %v809
  %v811 = vrot.slane %v810, 2
  %v812 = vadd.f32 %v810, %v811
  %v813 = vrot.slane %v812, 1
  %v814 = vadd.f32 %v812, %v813
  %v815 = vadd.f32 %v745, %v747
  %v816 = vadd.f32 %v815, %v749
  %v817 = vadd.f32 %v816, %v751
  %v818 = vrot.slane %v817, 4
  %v819 = vadd.f32 %v817, %v818
  %v820 = vrot.slane %v819, 2
  %v821 = vadd.f32 %v819, %v820
  %v822 = vrot.slane %v821, 1
  %v823 = vadd.f32 %v821, %v822
  %v824 = vmul.f32 %v796, 0.03125
  %v825 = vmul.f32 %v805, 0.03125
  %v826 = vmul.f32 %v814, 0.03125
  %v827 = vmul.f32 %v823, 0.03125
  %v832 = vrot.slane %v778, 7
  %v833 = vrot.slane %v787, 7
  %v834 = vrot.slane %v826, 7
  %v835 = vrot.slane %v827, 7
  %vm840 = vcmask 1040384
  %v841 = vsel %vm840, %v760, %v832
  %v842 = vsel %vm840, %v769, %v833
  %v843 = vsel %vm840, %v824, %v834
  %v844 = vsel %vm840, %v825, %v835
  %v845 = vld [vmem:[%s2] sm:$0xff]
  %v846 = vld [vmem:[%s2 + $0x8] sm:$0xff]
  %v847 = vld [vmem:[%s2 + $0x10] sm:$0xff]
  %v848 = vld [vmem:[%s2 + $0x18] sm:$0xff]
  %v849 = vld [vmem:[%s2 + $0x20] sm:$0xff]
  %v850 = vld [vmem:[%s2 + $0x28] sm:$0xff]
  %v851 = vld [vmem:[%s2 + $0x30] sm:$0xff]
  %v852 = vld [vmem:[%s2 + $0x38] sm:$0xff]
  %v853 = vld [vmem:[%s2 + $0x40] sm:$0xff]
  %v854 = vld [vmem:[%s2 + $0x48] sm:$0xff]
  %v855 = vld [vmem:[%s2 + $0x50] sm:$0xff]
  %v856 = vld [vmem:[%s2 + $0x58] sm:$0xff]
  %v857 = vld [vmem:[%s2 + $0x60] sm:$0xff]
  %v858 = vld [vmem:[%s2 + $0x68] sm:$0xff]
  %v859 = vld [vmem:[%s2 + $0x70] sm:$0xff]
  %v860 = vld [vmem:[%s2 + $0x78] sm:$0xff]
  %v861 = vld [vmem:[%s2 + $0x80] sm:$0xff]
  %v862 = vld [vmem:[%s2 + $0x88] sm:$0xff]
  %v863 = vld [vmem:[%s2 + $0x90] sm:$0xff]
  %v864 = vld [vmem:[%s2 + $0x98] sm:$0xff]
  %v865 = vld [vmem:[%s2 + $0xa0] sm:$0xff]
  %v866 = vld [vmem:[%s2 + $0xa8] sm:$0xff]
  %v867 = vld [vmem:[%s2 + $0xb0] sm:$0xff]
  %v868 = vld [vmem:[%s2 + $0xb8] sm:$0xff]
  %v869 = vld [vmem:[%s2 + $0xc0] sm:$0xff]
  %v870 = vld [vmem:[%s2 + $0xc8] sm:$0xff]
  %v871 = vld [vmem:[%s2 + $0xd0] sm:$0xff]
  %v872 = vld [vmem:[%s2 + $0xd8] sm:$0xff]
  %v873 = vld [vmem:[%s2 + $0xe0] sm:$0xff]
  %v874 = vld [vmem:[%s2 + $0xe8] sm:$0xff]
  %v875 = vld [vmem:[%s2 + $0xf0] sm:$0xff]
  %v876 = vld [vmem:[%s2 + $0xf8] sm:$0xff]
  %v877 = vld [vmem:[%s2 + $0x100] sm:$0xff]
  %v878 = vld [vmem:[%s2 + $0x108] sm:$0xff]
  %v879 = vld [vmem:[%s2 + $0x110] sm:$0xff]
  %v880 = vld [vmem:[%s2 + $0x118] sm:$0xff]
  %v881 = vld [vmem:[%s2 + $0x120] sm:$0xff]
  %v882 = vld [vmem:[%s2 + $0x128] sm:$0xff]
  %v883 = vld [vmem:[%s2 + $0x130] sm:$0xff]
  %v884 = vld [vmem:[%s2 + $0x138] sm:$0xff]
  %v885 = vld [vmem:[%s2 + $0x140] sm:$0xff]
  %v886 = vld [vmem:[%s2 + $0x148] sm:$0xff]
  %v887 = vld [vmem:[%s2 + $0x150] sm:$0xff]
  %v888 = vld [vmem:[%s2 + $0x158] sm:$0xff]
  %v889 = vld [vmem:[%s2 + $0x160] sm:$0xff]
  %v890 = vld [vmem:[%s2 + $0x168] sm:$0xff]
  %v891 = vld [vmem:[%s2 + $0x170] sm:$0xff]
  %v892 = vld [vmem:[%s2 + $0x178] sm:$0xff]
  %v893 = vld [vmem:[%s2 + $0x180] sm:$0xff]
  %v894 = vld [vmem:[%s2 + $0x188] sm:$0xff]
  %v895 = vld [vmem:[%s2 + $0x190] sm:$0xff]
  %v896 = vld [vmem:[%s2 + $0x198] sm:$0xff]
  %v897 = vld [vmem:[%s2 + $0x1a0] sm:$0xff]
  %v898 = vld [vmem:[%s2 + $0x1a8] sm:$0xff]
  %v899 = vld [vmem:[%s2 + $0x1b0] sm:$0xff]
  %v900 = vld [vmem:[%s2 + $0x1b8] sm:$0xff]
  %v901 = vld [vmem:[%s2 + $0x1c0] sm:$0xff]
  %v902 = vld [vmem:[%s2 + $0x1c8] sm:$0xff]
  %v903 = vld [vmem:[%s2 + $0x1d0] sm:$0xff]
  %v904 = vld [vmem:[%s2 + $0x1d8] sm:$0xff]
  %v905 = vld [vmem:[%s2 + $0x1e0] sm:$0xff]
  %v906 = vld [vmem:[%s2 + $0x1e8] sm:$0xff]
  %v907 = vld [vmem:[%s2 + $0x1f0] sm:$0xff]
  %v908 = vld [vmem:[%s2 + $0x1f8] sm:$0xff]
  %v909 = vld [vmem:[%s2 + $0x200] sm:$0xff]
  %v910 = vld [vmem:[%s2 + $0x208] sm:$0xff]
  %v911 = vld [vmem:[%s2 + $0x210] sm:$0xff]
  %v912 = vld [vmem:[%s2 + $0x218] sm:$0xff]
  %v913 = vld [vmem:[%s2 + $0x220] sm:$0xff]
  %v914 = vld [vmem:[%s2 + $0x228] sm:$0xff]
  %v915 = vld [vmem:[%s2 + $0x230] sm:$0xff]
  %v916 = vld [vmem:[%s2 + $0x238] sm:$0xff]
  %v917 = vld [vmem:[%s2 + $0x240] sm:$0xff]
  %v918 = vld [vmem:[%s2 + $0x248] sm:$0xff]
  %v919 = vld [vmem:[%s2 + $0x250] sm:$0xff]
  %v920 = vld [vmem:[%s2 + $0x258] sm:$0xff]
  %v921 = vld [vmem:[%s2 + $0x260] sm:$0xff]
  %v922 = vld [vmem:[%s2 + $0x268] sm:$0xff]
  %v923 = vld [vmem:[%s2 + $0x270] sm:$0xff]
  %v924 = vld [vmem:[%s2 + $0x278] sm:$0xff]
  %v925 = vld [vmem:[%s2 + $0x280] sm:$0xff]
  %v926 = vld [vmem:[%s2 + $0x288] sm:$0xff]
  %v927 = vld [vmem:[%s2 + $0x290] sm:$0xff]
  %v928 = vld [vmem:[%s2 + $0x298] sm:$0xff]
  %v929 = vld [vmem:[%s2 + $0x2a0] sm:$0xff]
  %v930 = vld [vmem:[%s2 + $0x2a8] sm:$0xff]
  %v931 = vld [vmem:[%s2 + $0x2b0] sm:$0xff]
  %v932 = vld [vmem:[%s2 + $0x2b8] sm:$0xff]
  %v933 = vld [vmem:[%s2 + $0x2c0] sm:$0xff]
  %v934 = vld [vmem:[%s2 + $0x2c8] sm:$0xff]
  %v935 = vld [vmem:[%s2 + $0x2d0] sm:$0xff]
  %v936 = vld [vmem:[%s2 + $0x2d8] sm:$0xff]
  %v937 = vld [vmem:[%s2 + $0x2e0] sm:$0xff]
  %v938 = vld [vmem:[%s2 + $0x2e8] sm:$0xff]
  %v939 = vld [vmem:[%s2 + $0x2f0] sm:$0xff]
  %v940 = vld [vmem:[%s2 + $0x2f8] sm:$0xff]
  %v941 = vld [vmem:[%s2 + $0x300] sm:$0xff]
  %v942 = vld [vmem:[%s2 + $0x308] sm:$0xff]
  %v943 = vld [vmem:[%s2 + $0x310] sm:$0xff]
  %v944 = vld [vmem:[%s2 + $0x318] sm:$0xff]
  %v945 = vld [vmem:[%s2 + $0x320] sm:$0xff]
  %v946 = vld [vmem:[%s2 + $0x328] sm:$0xff]
  %v947 = vld [vmem:[%s2 + $0x330] sm:$0xff]
  %v948 = vld [vmem:[%s2 + $0x338] sm:$0xff]
  %v949 = vld [vmem:[%s2 + $0x340] sm:$0xff]
  %v950 = vld [vmem:[%s2 + $0x348] sm:$0xff]
  %v951 = vld [vmem:[%s2 + $0x350] sm:$0xff]
  %v952 = vld [vmem:[%s2 + $0x358] sm:$0xff]
  %v953 = vld [vmem:[%s2 + $0x360] sm:$0xff]
  %v954 = vld [vmem:[%s2 + $0x368] sm:$0xff]
  %v955 = vld [vmem:[%s2 + $0x370] sm:$0xff]
  %v956 = vld [vmem:[%s2 + $0x378] sm:$0xff]
  %v957 = vld [vmem:[%s2 + $0x380] sm:$0xff]
  %v958 = vld [vmem:[%s2 + $0x388] sm:$0xff]
  %v959 = vld [vmem:[%s2 + $0x390] sm:$0xff]
  %v960 = vld [vmem:[%s2 + $0x398] sm:$0xff]
  %v961 = vld [vmem:[%s2 + $0x3a0] sm:$0xff]
  %v962 = vld [vmem:[%s2 + $0x3a8] sm:$0xff]
  %v963 = vld [vmem:[%s2 + $0x3b0] sm:$0xff]
  %v964 = vld [vmem:[%s2 + $0x3b8] sm:$0xff]
  %v965 = vld [vmem:[%s2 + $0x3c0] sm:$0xff]
  %v966 = vld [vmem:[%s2 + $0x3c8] sm:$0xff]
  %v967 = vld [vmem:[%s2 + $0x3d0] sm:$0xff]
  %v968 = vld [vmem:[%s2 + $0x3d8] sm:$0xff]
  %v969 = vld [vmem:[%s2 + $0x3e0] sm:$0xff]
  %v970 = vld [vmem:[%s2 + $0x3e8] sm:$0xff]
  %v971 = vld [vmem:[%s2 + $0x3f0] sm:$0xff]
  %v972 = vld [vmem:[%s2 + $0x3f8] sm:$0xff]
  %973 = vmatpush.msra.mxu0 %v875
  %974 = vmatpush.msra.mxu0 %v873
  %975 = vmatpush.msra.mxu0 %v871
  %976 = vmatpush.msra.mxu0 %v869
  %977 = vmatpush.msra.mxu0 %v867
  %978 = vmatpush.msra.mxu0 %v865
  %979 = vmatpush.msra.mxu0 %v863
  %980 = vmatpush.msra.mxu0 %v861
  %981 = vmatpush.msra.mxu0 %v859
  %982 = vmatpush.msra.mxu0 %v857
  %983 = vmatpush.msra.mxu0 %v855
  %984 = vmatpush.msra.mxu0 %v853
  %985 = vmatpush.msra.mxu0 %v851
  %986 = vmatpush.msra.mxu0 %v849
  %987 = vmatpush.msra.mxu0 %v847
  %988 = vmatpush.msra.mxu0 %v845
  %989 = vmatmul.f32.gmra.mxu0 %v841
  %v990 = vpop.f32.mrf.mxu0
  %v991 = vadd.f32 0.0, %v990
  %992 = vdwg.mxu0
  %993 = vmatpush.msra.mxu0 %v907
  %994 = vmatpush.msra.mxu0 %v905
  %995 = vmatpush.msra.mxu0 %v903
  %996 = vmatpush.msra.mxu0 %v901
  %997 = vmatpush.msra.mxu0 %v899
  %998 = vmatpush.msra.mxu0 %v897
  %999 = vmatpush.msra.mxu0 %v895
  %1000 = vmatpush.msra.mxu0 %v893
  %1001 = vmatpush.msra.mxu0 %v891
  %1002 = vmatpush.msra.mxu0 %v889
  %1003 = vmatpush.msra.mxu0 %v887
  %1004 = vmatpush.msra.mxu0 %v885
  %1005 = vmatpush.msra.mxu0 %v883
  %1006 = vmatpush.msra.mxu0 %v881
  %1007 = vmatpush.msra.mxu0 %v879
  %1008 = vmatpush.msra.mxu0 %v877
  %1009 = vmatmul.f32.gmra.mxu0 %v842
  %v1010 = vpop.f32.mrf.mxu0
  %v1011 = vadd.f32 %v991, %v1010
  %1012 = vdwg.mxu0
  %1013 = vmatpush.msra.mxu0 %v939
  %1014 = vmatpush.msra.mxu0 %v937
  %1015 = vmatpush.msra.mxu0 %v935
  %1016 = vmatpush.msra.mxu0 %v933
  %1017 = vmatpush.msra.mxu0 %v931
  %1018 = vmatpush.msra.mxu0 %v929
  %1019 = vmatpush.msra.mxu0 %v927
  %1020 = vmatpush.msra.mxu0 %v925
  %1021 = vmatpush.msra.mxu0 %v923
  %1022 = vmatpush.msra.mxu0 %v921
  %1023 = vmatpush.msra.mxu0 %v919
  %1024 = vmatpush.msra.mxu0 %v917
  %1025 = vmatpush.msra.mxu0 %v915
  %1026 = vmatpush.msra.mxu0 %v913
  %1027 = vmatpush.msra.mxu0 %v911
  %1028 = vmatpush.msra.mxu0 %v909
  %1029 = vmatmul.f32.gmra.mxu0 %v843
  %v1030 = vpop.f32.mrf.mxu0
  %v1031 = vadd.f32 %v1011, %v1030
  %1032 = vdwg.mxu0
  %1033 = vmatpush.msra.mxu0 %v971
  %1034 = vmatpush.msra.mxu0 %v969
  %1035 = vmatpush.msra.mxu0 %v967
  %1036 = vmatpush.msra.mxu0 %v965
  %1037 = vmatpush.msra.mxu0 %v963
  %1038 = vmatpush.msra.mxu0 %v961
  %1039 = vmatpush.msra.mxu0 %v959
  %1040 = vmatpush.msra.mxu0 %v957
  %1041 = vmatpush.msra.mxu0 %v955
  %1042 = vmatpush.msra.mxu0 %v953
  %1043 = vmatpush.msra.mxu0 %v951
  %1044 = vmatpush.msra.mxu0 %v949
  %1045 = vmatpush.msra.mxu0 %v947
  %1046 = vmatpush.msra.mxu0 %v945
  %1047 = vmatpush.msra.mxu0 %v943
  %1048 = vmatpush.msra.mxu0 %v941
  %1049 = vmatmul.f32.gmra.mxu0 %v844
  %v1050 = vpop.f32.mrf.mxu0
  %v1051 = vadd.f32 %v1031, %v1050
  %1052 = vdwg.mxu0
  %1053 = vmatpush.msra.mxu0 %v876
  %1054 = vmatpush.msra.mxu0 %v874
  %1055 = vmatpush.msra.mxu0 %v872
  %1056 = vmatpush.msra.mxu0 %v870
  %1057 = vmatpush.msra.mxu0 %v868
  %1058 = vmatpush.msra.mxu0 %v866
  %1059 = vmatpush.msra.mxu0 %v864
  %1060 = vmatpush.msra.mxu0 %v862
  %1061 = vmatpush.msra.mxu0 %v860
  %1062 = vmatpush.msra.mxu0 %v858
  %1063 = vmatpush.msra.mxu0 %v856
  %1064 = vmatpush.msra.mxu0 %v854
  %1065 = vmatpush.msra.mxu0 %v852
  %1066 = vmatpush.msra.mxu0 %v850
  %1067 = vmatpush.msra.mxu0 %v848
  %1068 = vmatpush.msra.mxu0 %v846
  %1069 = vmatmul.f32.gmra.mxu0 %v841
  %v1070 = vpop.f32.mrf.mxu0
  %v1071 = vadd.f32 0.0, %v1070
  %1072 = vdwg.mxu0
  %1073 = vmatpush.msra.mxu0 %v908
  %1074 = vmatpush.msra.mxu0 %v906
  %1075 = vmatpush.msra.mxu0 %v904
  %1076 = vmatpush.msra.mxu0 %v902
  %1077 = vmatpush.msra.mxu0 %v900
  %1078 = vmatpush.msra.mxu0 %v898
  %1079 = vmatpush.msra.mxu0 %v896
  %1080 = vmatpush.msra.mxu0 %v894
  %1081 = vmatpush.msra.mxu0 %v892
  %1082 = vmatpush.msra.mxu0 %v890
  %1083 = vmatpush.msra.mxu0 %v888
  %1084 = vmatpush.msra.mxu0 %v886
  %1085 = vmatpush.msra.mxu0 %v884
  %1086 = vmatpush.msra.mxu0 %v882
  %1087 = vmatpush.msra.mxu0 %v880
  %1088 = vmatpush.msra.mxu0 %v878
  %1089 = vmatmul.f32.gmra.mxu0 %v842
  %v1090 = vpop.f32.mrf.mxu0
  %v1091 = vadd.f32 %v1071, %v1090
  %1092 = vdwg.mxu0
  %1093 = vmatpush.msra.mxu0 %v940
  %1094 = vmatpush.msra.mxu0 %v938
  %1095 = vmatpush.msra.mxu0 %v936
  %1096 = vmatpush.msra.mxu0 %v934
  %1097 = vmatpush.msra.mxu0 %v932
  %1098 = vmatpush.msra.mxu0 %v930
  %1099 = vmatpush.msra.mxu0 %v928
  %1100 = vmatpush.msra.mxu0 %v926
  %1101 = vmatpush.msra.mxu0 %v924
  %1102 = vmatpush.msra.mxu0 %v922
  %1103 = vmatpush.msra.mxu0 %v920
  %1104 = vmatpush.msra.mxu0 %v918
  %1105 = vmatpush.msra.mxu0 %v916
  %1106 = vmatpush.msra.mxu0 %v914
  %1107 = vmatpush.msra.mxu0 %v912
  %1108 = vmatpush.msra.mxu0 %v910
  %1109 = vmatmul.f32.gmra.mxu0 %v843
  %v1110 = vpop.f32.mrf.mxu0
  %v1111 = vadd.f32 %v1091, %v1110
  %1112 = vdwg.mxu0
  %1113 = vmatpush.msra.mxu0 %v972
  %1114 = vmatpush.msra.mxu0 %v970
  %1115 = vmatpush.msra.mxu0 %v968
  %1116 = vmatpush.msra.mxu0 %v966
  %1117 = vmatpush.msra.mxu0 %v964
  %1118 = vmatpush.msra.mxu0 %v962
  %1119 = vmatpush.msra.mxu0 %v960
  %1120 = vmatpush.msra.mxu0 %v958
  %1121 = vmatpush.msra.mxu0 %v956
  %1122 = vmatpush.msra.mxu0 %v954
  %1123 = vmatpush.msra.mxu0 %v952
  %1124 = vmatpush.msra.mxu0 %v950
  %1125 = vmatpush.msra.mxu0 %v948
  %1126 = vmatpush.msra.mxu0 %v946
  %1127 = vmatpush.msra.mxu0 %v944
  %1128 = vmatpush.msra.mxu0 %v942
  %1129 = vmatmul.f32.gmra.mxu0 %v844
  %v1130 = vpop.f32.mrf.mxu0
  %v1131 = vadd.f32 %v1111, %v1130
  %1132 = vdwg.mxu0
  %v1133 = vld [vmem:[%s1] sm:$0x1]
  %v1134 = vld [vmem:[%s1 + $0x1] sm:$0x1]
  %v1135 = vsel %vm571, %v1051, 0.0
  %v1136 = vsel %vm571, %v1131, 0.0
  %v1137 = vadd.f32 %v1135, %v1136
  %1138 = vadd.xlane.f32.xlu0 %v1137
  %v1139 = vpop.xlane.xlu0 %1138
  %v1140 = vrot.slane %v1139, 4
  %v1141 = vadd.f32 %v1139, %v1140
  %v1142 = vrot.slane %v1141, 2
  %v1143 = vadd.f32 %v1141, %v1142
  %v1144 = vrot.slane %v1143, 1
  %v1145 = vadd.f32 %v1143, %v1144
  %s1146 = vtos %v1145
  %v1147 = vstv %s1146
  %v1148 = vmul.f32 %v1147, 0.001953125
  %v1149 = vsub.f32 %v1051, %v1148
  %v1150 = vsub.f32 %v1131, %v1148
  %v1151 = vmul.f32 %v1149, %v1149
  %v1152 = vmul.f32 %v1150, %v1150
  %v1153 = vsel %vm571, %v1151, 0.0
  %v1154 = vsel %vm571, %v1152, 0.0
  %v1155 = vadd.f32 %v1153, %v1154
  %1156 = vadd.xlane.f32.xlu0 %v1155
  %v1157 = vpop.xlane.xlu0 %1156
  %v1158 = vrot.slane %v1157, 4
  %v1159 = vadd.f32 %v1157, %v1158
  %v1160 = vrot.slane %v1159, 2
  %v1161 = vadd.f32 %v1159, %v1160
  %v1162 = vrot.slane %v1161, 1
  %v1163 = vadd.f32 %v1161, %v1162
  %s1164 = vtos %v1163
  %v1165 = vstv %s1164
  %v1166 = vmul.f32 %v1165, 0.001953125
  %v1167 = vadd.f32 %v1166, 1e-05
  %v1168 = vrsqrt.pop %v1167
  %v1169 = vmul.f32 %v1168, %v1167
  %v1170 = vmul.f32 %v1169, %v1168
  %v1171 = vmul.f32 0.5, %v1170
  %v1172 = vsub.f32 1.5, %v1171
  %v1173 = vmul.f32 %v1168, %v1172
  %vm1174 = vweird.f32 %v1167
  %vm1175 = vweird.f32 %v1168
  %vm1176 = vmor %vm1174, %vm1175
  %v1177 = vsel %vm1176, %v1168, %v1173
  %v1178 = vmul.f32 %v1133, %v1177
  %1180 = vrot.lane.b32.xlu0 %v1178, 54
  %v1181 = vpop.permute.xlu0 %1180
  %s1182 = vtos %v1181
  %v1183 = vstv %s1182
  %v1185 = vmul.f32 %v1149, %v1183
  %v1186 = vmul.f32 %v1150, %v1183
  %1188 = vrot.lane.b32.xlu0 %v1134, 54
  %v1189 = vpop.permute.xlu0 %1188
  %s1190 = vtos %v1189
  %v1191 = vstv %s1190
  %v1193 = vadd.f32 %v1185, %v1191
  %v1194 = vadd.f32 %v1186, %v1191
  %v1195 = vxor.u32 %v1193, 2147483648
  %v1196 = vxor.u32 %v1194, 2147483648
  %v1197 = vmul.f32 %v1195, 1.442695
  %v1198 = vpow.pop %v1197
  %v1199 = vmul.f32 %v1196, 1.442695
  %v1200 = vpow.pop %v1199
  %v1201 = vadd.f32 %v1198, 1.0
  %v1202 = vadd.f32 %v1200, 1.0
  %v1203 = vrcp.pop %v1201
  %v1204 = vmul.f32 %v1201, %v1203
  %v1205 = vsub.f32 1.0, %v1204
  %v1206 = vmul.f32 %v1203, %v1205
  %v1207 = vadd.f32 %v1203, %v1206
  %vm1208 = vweird.f32 %v1201
  %vm1209 = vweird.f32 %v1203
  %vm1210 = vmor %vm1208, %vm1209
  %v1211 = vsel %vm1210, %v1203, %v1207
  %v1212 = vand.u32 2147483647, %v1201
  %vm1213 = vcmp.eq.f32.partialorder %v1212, 8.507059e+37
  %v1214 = vand.u32 %v1201, 2147483648
  %v1215 = vor.u32 1.1754944e-38, %v1214
  %v1216 = vsel %vm1213, %v1215, %v1211
  %v1217 = vmul.f32 1.0, %v1216
  %v1218 = vrcp.pop %v1202
  %v1219 = vmul.f32 %v1202, %v1218
  %v1220 = vsub.f32 1.0, %v1219
  %v1221 = vmul.f32 %v1218, %v1220
  %v1222 = vadd.f32 %v1218, %v1221
  %vm1223 = vweird.f32 %v1202
  %vm1224 = vweird.f32 %v1218
  %vm1225 = vmor %vm1223, %vm1224
  %v1226 = vsel %vm1225, %v1218, %v1222
  %v1227 = vand.u32 2147483647, %v1202
  %vm1228 = vcmp.eq.f32.partialorder %v1227, 8.507059e+37
  %v1229 = vand.u32 %v1202, 2147483648
  %v1230 = vor.u32 1.1754944e-38, %v1229
  %v1231 = vsel %vm1228, %v1230, %v1226
  %v1232 = vmul.f32 1.0, %v1231
  %v1233 = vperm.slane %v1217, 0
  %v1234 = vperm.slane %v1232, 0
  %v1235 = vmul.f32 %v720, %v1233
  %v1236 = vmul.f32 %v721, %v1234
  %v1237 = vmul.f32 %v722, %v1233
  %v1238 = vmul.f32 %v723, %v1234
  %v1239 = vmul.f32 %v724, %v1233
  %v1240 = vmul.f32 %v725, %v1234
  %v1241 = vmul.f32 %v726, %v1233
  %v1242 = vmul.f32 %v727, %v1234
  %1243 = vst [vmem:[%s3] sm:$0xff] %v1235
  %1244 = vst [vmem:[%s3 + $0x8] sm:$0xff] %v1236
  %1245 = vst [vmem:[%s3 + $0x10] sm:$0xff] %v1237
  %1246 = vst [vmem:[%s3 + $0x18] sm:$0xff] %v1238
  %1247 = vst [vmem:[%s3 + $0x20] sm:$0xff] %v1239
  %1248 = vst [vmem:[%s3 + $0x28] sm:$0xff] %v1240
  %1249 = vst [vmem:[%s3 + $0x30] sm:$0xff] %v1241
  %1250 = vst [vmem:[%s3 + $0x38] sm:$0xff] %v1242
  %v1251 = vperm.slane %v1217, 1
  %v1252 = vperm.slane %v1232, 1
  %v1253 = vmul.f32 %v744, %v1251
  %v1254 = vmul.f32 %v745, %v1252
  %v1255 = vmul.f32 %v746, %v1251
  %v1256 = vmul.f32 %v747, %v1252
  %v1257 = vmul.f32 %v748, %v1251
  %v1258 = vmul.f32 %v749, %v1252
  %v1259 = vmul.f32 %v750, %v1251
  %v1260 = vmul.f32 %v751, %v1252
  %1261 = vst [vmem:[%s3 + $0x40] sm:$0xff] %v1253
  %1262 = vst [vmem:[%s3 + $0x48] sm:$0xff] %v1254
  %1263 = vst [vmem:[%s3 + $0x50] sm:$0xff] %v1255
  %1264 = vst [vmem:[%s3 + $0x58] sm:$0xff] %v1256
  %1265 = vst [vmem:[%s3 + $0x60] sm:$0xff] %v1257
  %1266 = vst [vmem:[%s3 + $0x68] sm:$0xff] %v1258
  %1267 = vst [vmem:[%s3 + $0x70] sm:$0xff] %v1259
  %1268 = vst [vmem:[%s3 + $0x78] sm:$0xff] %v1260
  // Predicated region
  $region14: #{block_forward.1} parent=0 // pred_check
    _
  $region15: #{block_forward.1} parent=0 // pred_check_branch
    %1270 = sbr.rel (0) target = $region17
  $region16: #{block_forward.1} parent=0 // pred_region
    _
  $region17: #{block_forward.1} parent=0 // pred_fallthru
    _
  // Predicated region
  $region18: #{block_forward.1} parent=0 // pred_check
    _
  $region19: #{block_forward.1} parent=0 // pred_check_branch
    %1272 = sbr.rel (0) target = $region21
  $region20: #{block_forward.1} parent=0 // pred_region
    _
  $region21: #{block_forward.1} parent=0 // pred_fallthru
    _

</llo_original>
